<compile_context>
chip_gen: v5e
topology: v5e:2x2
jax: 0.10.0
libtpu: 0.0.40
codegen_flags: <defaults>
</compile_context>

<pallas_src>
import functools
import math

import jax
import jax.numpy as jnp
from jax import lax
from jax.experimental import pallas as pl
from jax.experimental.pallas import tpu as pltpu

# ----- FusionNet configuration for base_model='resnet34' (fixed in __init__) --
BACKBONE_DIM = 512        # resnet34 feature channels
C_DIM = 512
NHEADS = 8
HEAD_DIM = C_DIM // NHEADS
DIM_FF = 2048
LN_EPS = 1e-5
BN_EPS = 1e-5

VMEM_LIMIT = 32 * 1024 * 1024      # v7x-safe (64 MiB physical per TC)


# ------------------------------------------------------------------ helpers --
def _layernorm(x, g, b):
    mu = jnp.mean(x, axis=-1, keepdims=True)
    xc = x - mu
    var = jnp.mean(xc * xc, axis=-1, keepdims=True)
    return xc * lax.rsqrt(var + LN_EPS) * g + b


def _erf_approx(x):
    # Abramowitz & Stegun 7.1.26 (|err| < 1.5e-7): exact-erf GELU parity using
    # only mul/add/exp/select (all lower in Mosaic).
    a1, a2, a3, a4, a5 = (0.254829592, -0.284496736, 1.421413741,
                          -1.453152027, 1.061405429)
    p = 0.3275911
    ax = jnp.abs(x)
    t = 1.0 / (1.0 + p * ax)
    poly = ((((a5 * t + a4) * t + a3) * t + a2) * t + a1) * t
    y = 1.0 - poly * jnp.exp(-ax * ax)
    return jnp.where(x >= 0, y, -y)


def _gelu_exact(x):
    # PyTorch nn.GELU() default is the exact erf form.
    return 0.5 * x * (1.0 + _erf_approx(x * (1.0 / math.sqrt(2.0))))


def _pick_row_tile(n):
    for t in (2048, 1024, 512, 256, 128, 64, 32, 16, 8):
        if n % t == 0:
            return t
    return n   # fallback: full array (always legal)


# ----------------------------------------- reduce_channel + ReLU + BN (x2) ---
def _reduce_bn_kernel(x_ref, w_ref, b_ref, scale_ref, shift_ref, o_ref):
    # 1x1 conv (matmul over channels) -> ReLU -> BN (running stats).
    x = x_ref[0].astype(jnp.bfloat16)                       # bf16 MXU input
    y = jnp.dot(x, w_ref[0], preferred_element_type=jnp.float32) + b_ref[0]
    y = jnp.maximum(y, 0.0)                                  # ReLU
    # BN scale applied AFTER ReLU: correct for any sign of gamma.
    o_ref[0] = y * scale_ref[0] + shift_ref[0]


def reduce_relu_bn(x_stack, w, b, bn_scale, bn_shift):
    """x_stack: (2, rows, C_in) — both streams in one pipelined call."""
    s_dim, n, c_in = x_stack.shape
    c_out = w.shape[-1]
    tile = _pick_row_tile(n)
    return pl.pallas_call(
        _reduce_bn_kernel,
        out_shape=jax.ShapeDtypeStruct((s_dim, n, c_out), jnp.float32),
        grid_spec=pltpu.PrefetchScalarGridSpec(
            num_scalar_prefetch=0,
            grid=(s_dim, n // tile),
            in_specs=[
                pl.BlockSpec((1, tile, c_in), lambda s, i: (s, i, 0)),
                pl.BlockSpec((1, c_in, c_out), lambda s, i: (s, 0, 0)),
                pl.BlockSpec((1, 1, c_out), lambda s, i: (s, 0, 0)),
                pl.BlockSpec((1, 1, c_out), lambda s, i: (s, 0, 0)),
                pl.BlockSpec((1, 1, c_out), lambda s, i: (s, 0, 0)),
            ],
            out_specs=pl.BlockSpec((1, tile, c_out), lambda s, i: (s, i, 0)),
        ),
        compiler_params=pltpu.CompilerParams(
            dimension_semantics=("parallel", "parallel"),
            vmem_limit_bytes=VMEM_LIMIT,
        ),
    )(x_stack, w, b, bn_scale, bn_shift)


# --------------- merged transformer: rgb SA, depth SA, CA fusion + fc + mean --
def _trear_block_kernel(src_ref, pos_ref, sel_ref,
                        wqkv_ref, bqkv_ref, wo_ref, bo_ref,
                        ln1g_ref, ln1b_ref, w1_ref, b1_ref, w2_ref, b2_ref,
                        ln2g_ref, ln2b_ref, fcw_ref, fcb_ref,
                        out_ref, state_ref, *, batch, seq):
    """grid=(3,), sequential ("arbitrary"):

      step 0: q=k=v = rgb rows (+pos on q,k)   -> state[0]
      step 1: q=k=v = depth rows (+pos on q,k) -> state[1]
      step 2: q = state[0], k=v = state[1], no pos
              -> fc_out + consensus mean -> out_ref

    Post-norm encoder layer (gelu FFN); dropout == identity (eval).
    TODO(synk): Transformer_Encoder / Transformer_CA / PositionalEncoding
    sources not provided; standard post-norm layer + DETR-style pos assumed.
    """
    D = C_DIM
    BT = batch * seq
    s = pl.program_id(0)
    is_fusion = s == pl.num_programs(0) - 1

    # Stage the HBM source rows into the persistent state scratch so every
    # step reads its q / kv sources with a cheap dynamic leading-axis index
    # (no vector select, no uninitialized reads).
    @pl.when(s == 0)
    def _():
        state_ref[0] = src_ref[0]

    @pl.when(s == 1)
    def _():
        state_ref[1] = src_ref[0]

    q_idx = lax.rem(s, 2)            # 0, 1, 0  -> step 2 queries rgb SA result
    kv_idx = jnp.minimum(s, 1)       # 0, 1, 1  -> step 2 attends depth SA result
    qsrc = state_ref[q_idx]          # (BT, D) f32
    kvsrc = state_ref[kv_idx]

    # Positional encoding only for the two self-attention steps.
    pos = pos_ref[...] * (s < 2).astype(jnp.float32)

    q_in = (qsrc + pos).astype(jnp.bfloat16)
    k_in = (kvsrc + pos).astype(jnp.bfloat16)
    v_in = kvsrc.astype(jnp.bfloat16)

    q = jnp.dot(q_in, wqkv_ref[0, :, 0:D],
                preferred_element_type=jnp.float32) + bqkv_ref[0, :, 0:D]
    k = jnp.dot(k_in, wqkv_ref[0, :, D:2 * D],
                preferred_element_type=jnp.float32) + bqkv_ref[0, :, D:2 * D]
    v = jnp.dot(v_in, wqkv_ref[0, :, 2 * D:3 * D],
                preferred_element_type=jnp.float32) + bqkv_ref[0, :, 2 * D:3 * D]

    # --- per-batch multi-head attention (no BT x BT cross-batch mask) --------
    scale = 1.0 / math.sqrt(HEAD_DIM)
    attn = jnp.zeros((BT, D), jnp.float32)
    for h in range(NHEADS):                                  # static unroll
        lo = h * HEAD_DIM
        # TODO(synk): 64-lane head slices (odd heads unaligned to 128 lanes);
        # modest relayout cost only — the kernel is weight-DMA bound.
        qh = q[:, lo:lo + HEAD_DIM].reshape(batch, seq, HEAD_DIM)
        kh = k[:, lo:lo + HEAD_DIM].reshape(batch, seq, HEAD_DIM)
        vh = v[:, lo:lo + HEAD_DIM].reshape(batch, seq, HEAD_DIM)
        sc = jnp.einsum('btd,bsd->bts', qh, kh,
                        preferred_element_type=jnp.float32) * scale
        sc = sc - jnp.max(sc, axis=-1, keepdims=True)
        p = jnp.exp(sc)
        p = p * pl.reciprocal(jnp.sum(p, axis=-1, keepdims=True), approx=True)
        ctx = jnp.einsum('bts,bsd->btd', p, vh,
                         preferred_element_type=jnp.float32)
        # Accumulate each head straight into the Wo contraction (no concat).
        attn = attn + jnp.dot(ctx.reshape(BT, HEAD_DIM).astype(jnp.bfloat16),
                              wo_ref[0, lo:lo + HEAD_DIM, :],
                              preferred_element_type=jnp.float32)
    attn = attn + bo_ref[0]

    x = _layernorm(qsrc + attn, ln1g_ref[0], ln1b_ref[0])

    h1 = jnp.dot(x.astype(jnp.bfloat16), w1_ref[0],
                 preferred_element_type=jnp.float32) + b1_ref[0]
    h1 = _gelu_exact(h1)
    h2 = jnp.dot(h1.astype(jnp.bfloat16), w2_ref[0],
                 preferred_element_type=jnp.float32) + b2_ref[0]

    y = _layernorm(x + h2, ln2g_ref[0], ln2b_ref[0])          # (BT, D)

    @pl.when(s == 0)
    def _():
        state_ref[0] = y                                      # rgb SA result

    @pl.when(s == 1)
    def _():
        state_ref[1] = y                                      # depth SA result

    @pl.when(is_fusion)
    def _():
        # fc_out + dropout(eval: identity) + ConsensusModule mean + squeeze(1),
        # done in the epilogue of the last grid step (lane-dense NCp columns).
        logits = jnp.dot(y.astype(jnp.bfloat16), fcw_ref[...],
                         preferred_element_type=jnp.float32) + fcb_ref[...]
        out_ref[...] = jnp.dot(sel_ref[...], logits,
                               preferred_element_type=jnp.float32)   # (B, NCp)


def transformer_head(seq_rows, pos_bt, sel, p, *, batch, seq):
    """seq_rows: (2, B*T, D) (rgb, depth).  Returns padded logits (B, NCp)."""
    _, BT, D = seq_rows.shape
    blocks = p["blocks"]
    ncp = p["fc_w_pad"].shape[1]

    def wspec(arr):
        nz = arr.ndim - 1
        return pl.BlockSpec((1,) + arr.shape[1:],
                            lambda s, _n=nz: (s,) + (0,) * _n)

    src_spec = pl.BlockSpec((1, BT, D), lambda s: (jnp.minimum(s, 1), 0, 0))
    pos_spec = pl.BlockSpec((BT, D), lambda s: (0, 0))
    sel_spec = pl.BlockSpec(sel.shape, lambda s: (0, 0))
    fcw_spec = pl.BlockSpec(p["fc_w_pad"].shape, lambda s: (0, 0))
    fcb_spec = pl.BlockSpec(p["fc_b_pad"].shape, lambda s: (0, 0))

    kernel = functools.partial(_trear_block_kernel, batch=batch, seq=seq)

    return pl.pallas_call(
        kernel,
        out_shape=jax.ShapeDtypeStruct((batch, ncp), jnp.float32),
        grid_spec=pltpu.PrefetchScalarGridSpec(
            num_scalar_prefetch=0,
            grid=(3,),
            in_specs=[src_spec, pos_spec, sel_spec,
                      wspec(blocks["wqkv"]), wspec(blocks["bqkv"]),
                      wspec(blocks["wo"]), wspec(blocks["bo"]),
                      wspec(blocks["ln1_g"]), wspec(blocks["ln1_b"]),
                      wspec(blocks["w1"]), wspec(blocks["b1"]),
                      wspec(blocks["w2"]), wspec(blocks["b2"]),
                      wspec(blocks["ln2_g"]), wspec(blocks["ln2_b"]),
                      fcw_spec, fcb_spec],
            out_specs=pl.BlockSpec((batch, ncp), lambda s: (0, 0)),
            scratch_shapes=[pltpu.VMEM((2, BT, D), jnp.float32)],
        ),
        compiler_params=pltpu.CompilerParams(
            # Sequential: step 2 depends on steps 0/1 via the VMEM scratch.
            dimension_semantics=("arbitrary",),
            vmem_limit_bytes=VMEM_LIMIT,
        ),
    )(seq_rows, pos_bt, sel,
      blocks["wqkv"], blocks["bqkv"], blocks["wo"], blocks["bo"],
      blocks["ln1_g"], blocks["ln1_b"], blocks["w1"], blocks["b1"],
      blocks["w2"], blocks["b2"], blocks["ln2_g"], blocks["ln2_b"],
      p["fc_w_pad"], p["fc_b_pad"])


# --------------------------------------------------------------------- glue --
def sinusoidal_pos_encoding(T, D):
    # TODO(synk): original PositionalEncoding source not provided; standard
    # sinusoidal table (added to q/k, DETR-style) is assumed.
    pos = jnp.arange(T, dtype=jnp.float32)[:, None]
    div = jnp.exp(jnp.arange(0, D, 2, dtype=jnp.float32) * (-math.log(10000.0) / D))
    pe = jnp.zeros((T, D), jnp.float32)
    pe = pe.at[:, 0::2].set(jnp.sin(pos * div))
    pe = pe.at[:, 1::2].set(jnp.cos(pos * div))
    return pe


def stub_backbone(frames, w_rgb, w_depth):
    # TODO(synk): the custom two-stream resnet34 backbone (`resnet` module
    # returning two feature maps) is not provided; substitute a deterministic
    # stand-in producing (N, 512, 2, 2) features per stream.
    rgb, depth = frames[:, :3], frames[:, 3:6]

    def stream(inp, w):
        N, C, H, W = inp.shape
        pooled = inp.reshape(N, C, 2, H // 2, 2, W // 2).mean(axis=(3, 5))
        feat = jnp.einsum('nchw,cd->ndhw', pooled, w)
        return jax.nn.relu(feat)

    return stream(rgb, w_rgb), stream(depth, w_depth)


def fusion_net_forward(rgb_feat, depth_feat, params, num_segments):
    N, C, H, W = rgb_feat.shape
    HW = H * W

    def to_rows(feat):
        # NCHW -> channels-last rows for the 1x1-conv matmul kernel.
        return jnp.transpose(feat, (0, 2, 3, 1)).reshape(N * HW, C)

    # Both streams in one pipelined reduce+ReLU+BN call.
    x_stack = jnp.stack([to_rows(rgb_feat), to_rows(depth_feat)])   # (2, N*HW, C)
    red = reduce_relu_bn(x_stack, params["reduce_w"], params["reduce_b"],
                         params["bn_scale"], params["bn_shift"])    # (2, N*HW, 512)

    # flatten(1) + view(-1, T, C*H*W) + AdaptiveAvgPool1d(C_DIM): for C*H*W
    # divisible by C_DIM this equals the per-channel spatial mean.
    seq_rows = red.reshape(2, N, HW, C_DIM).mean(axis=2)            # (2, B*T, D)

    T = num_segments
    B = N // T
    D = C_DIM
    pos_bt = jnp.tile(sinusoidal_pos_encoding(T, D), (B, 1))        # (B*T, D)
    # ConsensusModule mean-over-segments as a constant selection matrix.
    sel = jnp.kron(jnp.eye(B, dtype=jnp.float32),
                   jnp.full((1, T), 1.0 / T, jnp.float32))          # (B, B*T)

    out_pad = transformer_head(seq_rows, pos_bt, sel, params, batch=B, seq=T)
    return out_pad[:, :params["num_class"]]                         # un-pad


def trear_forward(x, params, num_segments, new_length=1):
    sample_len = 6 * new_length
    H, W = x.shape[-2], x.shape[-1]
    frames = x.reshape(-1, sample_len, H, W)
    base_out_1, base_out_2 = stub_backbone(frames, params["stub_w_rgb"],
                                           params["stub_w_depth"])
    return fusion_net_forward(base_out_1, base_out_2,
                              params["fusion_net"], num_segments)


# ------------------------------------------------------------------- params --
def init_params(key, num_class):
    keys = jax.random.split(key, 16)
    kit = iter(keys)

    def nrm(shape, scale=0.02):
        return scale * jax.random.normal(next(kit), shape, jnp.float32)

    # Transformer blocks stacked on a leading axis:
    #   0 = rgb encoder (SA), 1 = depth encoder (SA), 2 = fusion (CA).
    # Large matmul weights in bf16 (halves HBM DMA); biases/LN params f32.
    n_blk = 3
    blocks = dict(
        wqkv=nrm((n_blk, C_DIM, 3 * C_DIM)).astype(jnp.bfloat16),
        bqkv=jnp.zeros((n_blk, 1, 3 * C_DIM), jnp.float32),
        wo=nrm((n_blk, C_DIM, C_DIM)).astype(jnp.bfloat16),
        bo=jnp.zeros((n_blk, 1, C_DIM), jnp.float32),
        ln1_g=jnp.ones((n_blk, 1, C_DIM), jnp.float32),
        ln1_b=jnp.zeros((n_blk, 1, C_DIM), jnp.float32),
        w1=nrm((n_blk, C_DIM, DIM_FF)).astype(jnp.bfloat16),
        b1=jnp.zeros((n_blk, 1, DIM_FF), jnp.float32),
        w2=nrm((n_blk, DIM_FF, C_DIM)).astype(jnp.bfloat16),
        b2=jnp.zeros((n_blk, 1, C_DIM), jnp.float32),
        ln2_g=jnp.ones((n_blk, 1, C_DIM), jnp.float32),
        ln2_b=jnp.zeros((n_blk, 1, C_DIM), jnp.float32),
    )

    # reduce_channel{1,2} + BN (eval-mode running stats), stacked on stream axis.
    gamma = jnp.ones((2, 1, C_DIM), jnp.float32)
    beta = jnp.zeros((2, 1, C_DIM), jnp.float32)
    rmean = jnp.zeros((2, 1, C_DIM), jnp.float32)
    rvar = jnp.ones((2, 1, C_DIM), jnp.float32)
    bn_scale = gamma * lax.rsqrt(rvar + BN_EPS)
    bn_shift = beta - rmean * bn_scale
    reduce_w = jnp.stack([nrm((BACKBONE_DIM, C_DIM)),
                          nrm((BACKBONE_DIM, C_DIM))]).astype(jnp.bfloat16)
    reduce_b = jnp.zeros((2, 1, C_DIM), jnp.float32)

    nc_pad = ((num_class + 127) // 128) * 128      # lane-dense fc output
    fc_w = nrm((C_DIM, num_class))
    fc_b = jnp.zeros((num_class,), jnp.float32)
    fusion_net = dict(
        reduce_w=reduce_w, reduce_b=reduce_b,
        bn_scale=bn_scale, bn_shift=bn_shift,
        blocks=blocks,
        fc_w_pad=jnp.zeros((C_DIM, nc_pad), jnp.float32)
                    .at[:, :num_class].set(fc_w).astype(jnp.bfloat16),
        fc_b_pad=jnp.zeros((1, nc_pad), jnp.float32).at[0, :num_class].set(fc_b),
        num_class=num_class,
    )
    return dict(
        stub_w_rgb=nrm((3, BACKBONE_DIM)),
        stub_w_depth=nrm((3, BACKBONE_DIM)),
        fusion_net=fusion_net,
    )


# --------------------------------------------------------------------- main --
if __name__ == "__main__":
    num_class = 45
    num_segments = 4
    B = 2
    H = W = 8

    key = jax.random.PRNGKey(0)
    kx, kp = jax.random.split(key)
    # Trear input: (B, num_segments * 6 * new_length, H, W), NCHW.
    x = jax.random.normal(kx, (B, num_segments * 6, H, W), jnp.float32)
    params = init_params(kp, num_class)

    out = trear_forward(x, params, num_segments)
    out = jax.block_until_ready(out)
    assert out.shape == (B, num_class), out.shape
    assert bool(jnp.all(jnp.isfinite(out)))
    print("KERNEL_OK")
</pallas_src>

<mosaic_0001>
module attributes {stable_mosaic.version = 11 : i64} {
  func.func @_reduce_bn_kernel(%arg0: i32, %arg1: i32, %arg2: memref<1x32x512xf32, #tpu.memory_space<vmem>>, %arg3: memref<1x512x512xbf16, #tpu.memory_space<vmem>>, %arg4: memref<1x1x512xf32, #tpu.memory_space<vmem>>, %arg5: memref<1x1x512xf32, #tpu.memory_space<vmem>>, %arg6: memref<1x1x512xf32, #tpu.memory_space<vmem>>, %arg7: memref<1x32x512xf32, #tpu.memory_space<vmem>>) attributes {dimension_semantics = [#tpu.dimension_semantics<parallel>, #tpu.dimension_semantics<parallel>], iteration_bounds = array<i64: 2, 1>, scalar_prefetch = 0 : i64, scratch_operands = 0 : i64, tpu.core_type = #tpu.core_type<tc>, window_params = [{transform_indices = @transform_0, window_bounds = array<i64: 1, 32, 512>}, {transform_indices = @transform_1, window_bounds = array<i64: 1, 512, 512>}, {transform_indices = @transform_2, window_bounds = array<i64: 1, 1, 512>}, {transform_indices = @transform_3, window_bounds = array<i64: 1, 1, 512>}, {transform_indices = @transform_4, window_bounds = array<i64: 1, 1, 512>}, {transform_indices = @transform_5, window_bounds = array<i64: 1, 32, 512>}]} {
    %c0 = arith.constant 0 : index
    %c0_0 = arith.constant 0 : index
    %c0_1 = arith.constant 0 : index
    %0 = vector.load %arg2[%c0, %c0_0, %c0_1] : memref<1x32x512xf32, #tpu.memory_space<vmem>>, vector<1x32x512xf32>
    %1 = vector.shape_cast %0 : vector<1x32x512xf32> to vector<32x512xf32>
    %2 = arith.truncf %1 : vector<32x512xf32> to vector<32x512xbf16>
    %c0_2 = arith.constant 0 : index
    %c0_3 = arith.constant 0 : index
    %c0_4 = arith.constant 0 : index
    %3 = vector.load %arg3[%c0_2, %c0_3, %c0_4] : memref<1x512x512xbf16, #tpu.memory_space<vmem>>, vector<1x512x512xbf16>
    %4 = vector.shape_cast %3 : vector<1x512x512xbf16> to vector<512x512xbf16>
    %cst = arith.constant dense<0.000000e+00> : vector<32x512xf32>
    %5 = tpu.matmul %2, %4, %cst {dimension_numbers = #tpu.dot_dimension_numbers<[1], [0], [0], [1], [0, 0, 1, 1], [], []>} : vector<32x512xbf16>, vector<512x512xbf16>, vector<32x512xf32> -> vector<32x512xf32>
    %c0_5 = arith.constant 0 : index
    %c0_6 = arith.constant 0 : index
    %c0_7 = arith.constant 0 : index
    %6 = vector.load %arg4[%c0_5, %c0_6, %c0_7] : memref<1x1x512xf32, #tpu.memory_space<vmem>>, vector<1x1x512xf32>
    %7 = vector.shape_cast %6 : vector<1x1x512xf32> to vector<1x512xf32>
    %8 = vector.broadcast %7 : vector<1x512xf32> to vector<32x512xf32>
    %9 = arith.addf %5, %8 : vector<32x512xf32>
    %cst_8 = arith.constant 0.000000e+00 : f32
    %10 = vector.broadcast %cst_8 : f32 to vector<32x512xf32>
    %11 = arith.maximumf %9, %10 : vector<32x512xf32>
    %c0_9 = arith.constant 0 : index
    %c0_10 = arith.constant 0 : index
    %c0_11 = arith.constant 0 : index
    %12 = vector.load %arg5[%c0_9, %c0_10, %c0_11] : memref<1x1x512xf32, #tpu.memory_space<vmem>>, vector<1x1x512xf32>
    %13 = vector.shape_cast %12 : vector<1x1x512xf32> to vector<1x512xf32>
    %14 = vector.broadcast %13 : vector<1x512xf32> to vector<32x512xf32>
    %15 = arith.mulf %11, %14 : vector<32x512xf32>
    %c0_12 = arith.constant 0 : index
    %c0_13 = arith.constant 0 : index
    %c0_14 = arith.constant 0 : index
    %16 = vector.load %arg6[%c0_12, %c0_13, %c0_14] : memref<1x1x512xf32, #tpu.memory_space<vmem>>, vector<1x1x512xf32>
    %17 = vector.shape_cast %16 : vector<1x1x512xf32> to vector<1x512xf32>
    %18 = vector.broadcast %17 : vector<1x512xf32> to vector<32x512xf32>
    %19 = arith.addf %15, %18 : vector<32x512xf32>
    %c0_15 = arith.constant 0 : index
    %c0_16 = arith.constant 0 : index
    %c0_17 = arith.constant 0 : index
    %20 = vector.load %arg7[%c0_15, %c0_16, %c0_17] : memref<1x32x512xf32, #tpu.memory_space<vmem>>, vector<1x32x512xf32>
    %21 = vector.shape_cast %20 : vector<1x32x512xf32> to vector<32x512xf32>
    %22 = vector.shape_cast %19 : vector<32x512xf32> to vector<1x32x512xf32>
    tpu.vector_store %arg7[%c0_15, %c0_16, %c0_17], %22 {strides = array<i32>} : memref<1x32x512xf32, #tpu.memory_space<vmem>>, vector<1x32x512xf32>,
    return
  }
  func.func @transform_0(%arg0: i32, %arg1: i32) -> (i32, i32, i32) {
    %c0_i32 = arith.constant 0 : i32
    %c0_i32_0 = arith.constant 0 : i32
    return %arg0, %arg1, %c0_i32 : i32, i32, i32
  }
  func.func @transform_1(%arg0: i32, %arg1: i32) -> (i32, i32, i32) {
    %c0_i32 = arith.constant 0 : i32
    %c0_i32_0 = arith.constant 0 : i32
    %c0_i32_1 = arith.constant 0 : i32
    return %arg0, %c0_i32, %c0_i32_0 : i32, i32, i32
  }
  func.func @transform_2(%arg0: i32, %arg1: i32) -> (i32, i32, i32) {
    %c0_i32 = arith.constant 0 : i32
    %c0_i32_0 = arith.constant 0 : i32
    %c0_i32_1 = arith.constant 0 : i32
    return %arg0, %c0_i32, %c0_i32_0 : i32, i32, i32
  }
  func.func @transform_3(%arg0: i32, %arg1: i32) -> (i32, i32, i32) {
    %c0_i32 = arith.constant 0 : i32
    %c0_i32_0 = arith.constant 0 : i32
    %c0_i32_1 = arith.constant 0 : i32
    return %arg0, %c0_i32, %c0_i32_0 : i32, i32, i32
  }
  func.func @transform_4(%arg0: i32, %arg1: i32) -> (i32, i32, i32) {
    %c0_i32 = arith.constant 0 : i32
    %c0_i32_0 = arith.constant 0 : i32
    %c0_i32_1 = arith.constant 0 : i32
    return %arg0, %c0_i32, %c0_i32_0 : i32, i32, i32
  }
  func.func @transform_5(%arg0: i32, %arg1: i32) -> (i32, i32, i32) {
    %c0_i32 = arith.constant 0 : i32
    %c0_i32_0 = arith.constant 0 : i32
    return %arg0, %arg1, %c0_i32 : i32, i32, i32
  }
}

</mosaic_0001>

<llo_original>
// kernel: tpu_custom_call.1
$region0: #{tpu_custom_call.1}
  #allocation0 [shape = 'u32[]', space=smem, size = 0x4, offset = 0x4, fixed_abs, tag = 'smem constant byte address 0x4 - core index']
  #allocation1 [shape = 'u32[72,128]{1,0:T(1,128)}', space=vmem, size = 0x9000, scoped, tag = 'internal scratch']
  %s0 = inlined_call_operand.hbm [shape: f32[2,32,512], index: 0, kind: input, shape index: {}]
  %s1 = inlined_call_operand.hbm [shape: bf16[2,512,512], index: 1, kind: input, shape index: {}]
  %s2 = inlined_call_operand.hbm [shape: f32[2,1,512], index: 2, kind: input, shape index: {}]
  %s3 = inlined_call_operand.hbm [shape: f32[2,1,512], index: 3, kind: input, shape index: {}]
  %s4 = inlined_call_operand.hbm [shape: f32[2,1,512], index: 4, kind: input, shape index: {}]
  %s5 = inlined_call_operand.hbm [shape: f32[2,32,512], index: 5, kind: output, shape index: {}]
  %s6 = sld [smem:[#allocation0]]
  $region73: #{tpu_custom_call.1} parent=0
    _
  %s8 = ssub.s32 1, %s6
  %s9 = scalar_select 0, %s8, %s6
  $region1: #{tpu_custom_call.1} parent=0
    #allocation2 [shape = 'u8[131072]{0}', space=vmem, size = 0x20000, scoped, tag = 'input window, operand 0']
    #allocation3 [shape = 's32[2]{0}', space=sflag, size = 0x8, scoped, tag = 'scoped memory for tpu_custom_call.1']
    #allocation4 [shape = 's32[2]{0}', space=sflag, size = 0x8, scoped, tag = 'scoped memory for tpu_custom_call.1']
    #allocation5 [shape = 'u8[1048576]{0}', space=vmem, size = 0x100000, scoped, tag = 'input window, operand 1']
    #allocation6 [shape = 's32[2]{0}', space=sflag, size = 0x8, scoped, tag = 'scoped memory for tpu_custom_call.1']
    #allocation7 [shape = 'u8[4096]{0}', space=vmem, size = 0x1000, scoped, tag = 'input window, operand 2']
    #allocation8 [shape = 'u8[4096]{0}', space=vmem, size = 0x1000, scoped, tag = 'input window, operand 3']
    #allocation9 [shape = 's32[2]{0}', space=sflag, size = 0x8, scoped, tag = 'scoped memory for tpu_custom_call.1']
    #allocation10 [shape = 'u8[4096]{0}', space=vmem, size = 0x1000, scoped, tag = 'input window, operand 4']
    #allocation11 [shape = 'u8[131072]{0}', space=vmem, size = 0x20000, scoped, tag = 'output window, operand 0']
    %10 = vsyncpa [#allocation3], 0
    %s11 = scalar_lea.sflag [#allocation3], 1
    %12 = vsyncpa %s11, 0
    %13 = vsyncpa [#allocation6], 0
    %s14 = scalar_lea.sflag [#allocation6], 1
    %15 = vsyncpa %s14, 0
    %16 = vsyncpa [#allocation9], 0
    %s17 = scalar_lea.sflag [#allocation9], 1
    %18 = vsyncpa %s17, 0
    %19 = vsyncpa [#allocation4], 0
    %s20 = scalar_lea.sflag [#allocation4], 1
    %21 = vsyncpa %s20, 0
    loop: start=0, step=1, limit=4
    $region2: #{tpu_custom_call.1} parent=1 // loop_pre_header
      _
    $region3: #{tpu_custom_call.1} parent=1 // loop_header
      %s23 = sphi 0, %s27
      %p24 = scmp.ge.s32.totalorder %s23, 4
      %s30 = sphi 0, %s42
      %s31 = sphi 0, %s38
      %s32 = sphi 0, %s30
      %s33 = sphi 0, %s31
      %s34 = sphi 0, %s32
      %s35 = sphi 0, %s33
      %s47 = sphi 0, %s49
      %s50 = sphi 0, %s47
      %s51 = sphi 0, %s50
      %s67 = sphi 0, %s51
      %s73 = sphi 0, %s75
      %s76 = sphi 0, %s73
      %s77 = sphi 0, %s76
      %s93 = sphi 0, %s77
      %s99 = sphi 0, %s101
      %s102 = sphi 0, %s99
      %s103 = sphi 0, %s102
      %s119 = sphi 0, %s103
      %s125 = sphi 0, %s127
      %s128 = sphi 0, %s125
      %s129 = sphi 0, %s128
      %s145 = sphi 0, %s129
      %s151 = sphi 0, %s153
      %s154 = sphi 0, %s151
      %s155 = sphi 0, %s154
      %s171 = sphi 0, %s155
      %s179 = sphi 0, %s181
      %s182 = sphi 0, %s179
      %s183 = sphi 0, %s182
      %s199 = sphi 0, %s183
    $region4: #{tpu_custom_call.1} parent=1 // loop_header_branch
      %26 = sbr.rel (%p24) target = $region8
    $region5: #{tpu_custom_call.1} parent=1 // loop_body
      %s28 = ssub.s32 %s23, 1
      %s29 = ssub.s32 %s23, 2
      %s36 = sadd.s32 1, %s31
      %p37 = scmp.ge.s32.totalorder %s36, 1
      %s38 = scalar_select %p37, 0, %s36
      %s39 = sadd.s32 1, %s30
      %s40 = scalar_select %p37, %s39, %s30
      %p41 = scmp.ge.s32.totalorder %s40, 2
      %s42 = scalar_select %p41, 0, %s40
      %s43 = ssub.s32 %s30, %s42
      %s44 = ssub.s32 %s31, %s38
      %s45 = sor.u32 %s43, %s44
      %p46 = scmp.eq.s32.totalorder %s45, 0
      %s48 = sadd.s32 %s47, 1
      %s49 = scalar_select %p46, %s47, %s48
      %p52 = pneg %p46
      %p53 = scmp.eq.s32.totalorder %s23, 1
      %p54 = por %p52, %p53
      %p55 = scmp.ne.s32.totalorder %s47, %s50
      %p56 = scmp.eq.s32.totalorder %s23, 0
      %p57 = por %p55, %p56
      %p58 = scmp.ne.s32.totalorder %s47, %s50
      %p59 = scmp.eq.s32.totalorder %s28, 1
      %p60 = por %p58, %p59
      %p61 = scmp.ne.s32.totalorder %s50, %s51
      %p62 = scmp.eq.s32.totalorder %s28, 0
      %p63 = por %p61, %p62
      %p64 = scmp.ne.s32.totalorder %s50, %s51
      %p65 = scmp.eq.s32.totalorder %s29, 1
      %p66 = por %p64, %p65
      %p68 = scmp.ne.s32.totalorder %s51, %s67
      %p69 = scmp.eq.s32.totalorder %s29, 0
      %p70 = por %p68, %p69
      %s71 = ssub.s32 %s30, %s42
      %p72 = scmp.eq.s32.totalorder %s71, 0
      %s74 = sadd.s32 %s73, 1
      %s75 = scalar_select %p72, %s73, %s74
      %p78 = pneg %p72
      %p79 = scmp.eq.s32.totalorder %s23, 1
      %p80 = por %p78, %p79
      %p81 = scmp.ne.s32.totalorder %s73, %s76
      %p82 = scmp.eq.s32.totalorder %s23, 0
      %p83 = por %p81, %p82
      %p84 = scmp.ne.s32.totalorder %s73, %s76
      %p85 = scmp.eq.s32.totalorder %s28, 1
      %p86 = por %p84, %p85
      %p87 = scmp.ne.s32.totalorder %s76, %s77
      %p88 = scmp.eq.s32.totalorder %s28, 0
      %p89 = por %p87, %p88
      %p90 = scmp.ne.s32.totalorder %s76, %s77
      %p91 = scmp.eq.s32.totalorder %s29, 1
      %p92 = por %p90, %p91
      %p94 = scmp.ne.s32.totalorder %s77, %s93
      %p95 = scmp.eq.s32.totalorder %s29, 0
      %p96 = por %p94, %p95
      %s97 = ssub.s32 %s30, %s42
      %p98 = scmp.eq.s32.totalorder %s97, 0
      %s100 = sadd.s32 %s99, 1
      %s101 = scalar_select %p98, %s99, %s100
      %p104 = pneg %p98
      %p105 = scmp.eq.s32.totalorder %s23, 1
      %p106 = por %p104, %p105
      %p107 = scmp.ne.s32.totalorder %s99, %s102
      %p108 = scmp.eq.s32.totalorder %s23, 0
      %p109 = por %p107, %p108
      %p110 = scmp.ne.s32.totalorder %s99, %s102
      %p111 = scmp.eq.s32.totalorder %s28, 1
      %p112 = por %p110, %p111
      %p113 = scmp.ne.s32.totalorder %s102, %s103
      %p114 = scmp.eq.s32.totalorder %s28, 0
      %p115 = por %p113, %p114
      %p116 = scmp.ne.s32.totalorder %s102, %s103
      %p117 = scmp.eq.s32.totalorder %s29, 1
      %p118 = por %p116, %p117
      %p120 = scmp.ne.s32.totalorder %s103, %s119
      %p121 = scmp.eq.s32.totalorder %s29, 0
      %p122 = por %p120, %p121
      %s123 = ssub.s32 %s30, %s42
      %p124 = scmp.eq.s32.totalorder %s123, 0
      %s126 = sadd.s32 %s125, 1
      %s127 = scalar_select %p124, %s125, %s126
      %p130 = pneg %p124
      %p131 = scmp.eq.s32.totalorder %s23, 1
      %p132 = por %p130, %p131
      %p133 = scmp.ne.s32.totalorder %s125, %s128
      %p134 = scmp.eq.s32.totalorder %s23, 0
      %p135 = por %p133, %p134
      %p136 = scmp.ne.s32.totalorder %s125, %s128
      %p137 = scmp.eq.s32.totalorder %s28, 1
      %p138 = por %p136, %p137
      %p139 = scmp.ne.s32.totalorder %s128, %s129
      %p140 = scmp.eq.s32.totalorder %s28, 0
      %p141 = por %p139, %p140
      %p142 = scmp.ne.s32.totalorder %s128, %s129
      %p143 = scmp.eq.s32.totalorder %s29, 1
      %p144 = por %p142, %p143
      %p146 = scmp.ne.s32.totalorder %s129, %s145
      %p147 = scmp.eq.s32.totalorder %s29, 0
      %p148 = por %p146, %p147
      %s149 = ssub.s32 %s30, %s42
      %p150 = scmp.eq.s32.totalorder %s149, 0
      %s152 = sadd.s32 %s151, 1
      %s153 = scalar_select %p150, %s151, %s152
      %p156 = pneg %p150
      %p157 = scmp.eq.s32.totalorder %s23, 1
      %p158 = por %p156, %p157
      %p159 = scmp.ne.s32.totalorder %s151, %s154
      %p160 = scmp.eq.s32.totalorder %s23, 0
      %p161 = por %p159, %p160
      %p162 = scmp.ne.s32.totalorder %s151, %s154
      %p163 = scmp.eq.s32.totalorder %s28, 1
      %p164 = por %p162, %p163
      %p165 = scmp.ne.s32.totalorder %s154, %s155
      %p166 = scmp.eq.s32.totalorder %s28, 0
      %p167 = por %p165, %p166
      %p168 = scmp.ne.s32.totalorder %s154, %s155
      %p169 = scmp.eq.s32.totalorder %s29, 1
      %p170 = por %p168, %p169
      %p172 = scmp.ne.s32.totalorder %s155, %s171
      %p173 = scmp.eq.s32.totalorder %s29, 0
      %p174 = por %p172, %p173
      %s175 = ssub.s32 %s30, %s42
      %s176 = ssub.s32 %s31, %s38
      %s177 = sor.u32 %s175, %s176
      %p178 = scmp.eq.s32.totalorder %s177, 0
      %s180 = sadd.s32 %s179, 1
      %s181 = scalar_select %p178, %s179, %s180
      %p184 = pneg %p178
      %p185 = scmp.eq.s32.totalorder %s23, 1
      %p186 = por %p184, %p185
      %p187 = scmp.ne.s32.totalorder %s179, %s182
      %p188 = scmp.eq.s32.totalorder %s23, 0
      %p189 = por %p187, %p188
      %p190 = scmp.ne.s32.totalorder %s179, %s182
      %p191 = scmp.eq.s32.totalorder %s28, 1
      %p192 = por %p190, %p191
      %p193 = scmp.ne.s32.totalorder %s182, %s183
      %p194 = scmp.eq.s32.totalorder %s28, 0
      %p195 = por %p193, %p194
      %p196 = scmp.ne.s32.totalorder %s182, %s183
      %p197 = scmp.eq.s32.totalorder %s29, 1
      %p198 = por %p196, %p197
      %p200 = scmp.ne.s32.totalorder %s183, %s199
      %p201 = scmp.eq.s32.totalorder %s29, 0
      %p202 = por %p200, %p201
      %p203 = scmp.le.s32.totalorder 1, %s23
      %p204 = scmp.lt.s32.totalorder %s23, 3
      %p205 = pnand %p203, %p204
      %p206 = pneg %p205
      // Predicated region
      $region9: #{tpu_custom_call.1} parent=5 // pred_check
        _
      $region10: #{tpu_custom_call.1} parent=5 // pred_check_branch
        %208 = sbr.rel (%p205) target = $region12
      $region11: #{tpu_custom_call.1} parent=5 // pred_region
        %s209 = ssub.s32 %s23, 1
      $region12: #{tpu_custom_call.1} parent=5 // pred_fallthru
        _
      %p210 = scmp.lt.s32.totalorder %s23, 2
      // Predicated region
      $region13: #{tpu_custom_call.1} parent=5 // pred_check
        %p211 = pneg %p210
      $region14: #{tpu_custom_call.1} parent=5 // pred_check_branch
        %213 = sbr.rel (%p211) target = $region16
      $region15: #{tpu_custom_call.1} parent=5 // pred_region
        // Predicated region
        $region17: #{tpu_custom_call.1} parent=15 // pred_check
          %p214 = pneg %p57
        $region18: #{tpu_custom_call.1} parent=15 // pred_check_branch
          %216 = sbr.rel (%p214) target = $region20
        $region19: #{tpu_custom_call.1} parent=15 // pred_region
          %s217 = sand.u32 %s47, 1
          %s218 = scalar_lea.sflag [#allocation3], %s217
          %s219 = sand.u32 %s47, 1
          %s220 = smul.addr %s219, 128
          %s221 = scalar_lea.vmem [#allocation2], %s220
          %s222 = smul.u32 4, %s31
          %224 = vsyncadd %s218, 0
          %s225 = smul.addr %s222, 4
          %s226 = smul.addr %s30, 16
          %s227 = sadd.s32 %s225, %s226
          %s228 = smul.addr %s227, 8
          %s229 = scalar_lea.hbm %s0, %s228
          %s230 = sshll.u32 %s229, 4
          %s231 = int_to_ptr.hbm [resolvable:$true] %s230
          %s232 = sshll.u32 %s221, 4
          %s233 = int_to_ptr.vmem [resolvable:$true] %s232
          %238 = dma.hbm_to_vmem [thread:$0]  %s231, 2048, %s233, %s218, 512, 512, 32
        $region20: #{tpu_custom_call.1} parent=15 // pred_fallthru
          _
        // Predicated region
        $region21: #{tpu_custom_call.1} parent=15 // pred_check
          %p239 = pneg %p83
        $region22: #{tpu_custom_call.1} parent=15 // pred_check_branch
          %241 = sbr.rel (%p239) target = $region24
        $region23: #{tpu_custom_call.1} parent=15 // pred_region
          %s242 = sand.u32 %s23, 1
          %s243 = scalar_lea.sflag [#allocation6], %s242
          %s244 = sand.u32 %s73, 1
          %s245 = smul.addr %s244, 1024
          %s246 = scalar_lea.vmem [#allocation5], %s245
          %248 = vsyncadd %s243, 0
          %s249 = smul.addr %s30, 256
          %s250 = smul.addr %s249, 4
          %s251 = scalar_lea.hbm %s1, %s250
          %s252 = sshll.u32 %s251, 4
          %s253 = int_to_ptr.hbm [resolvable:$true] %s252
          %s254 = sshll.u32 %s246, 4
          %s255 = int_to_ptr.vmem [resolvable:$true] %s254
          %260 = dma.hbm_to_vmem [thread:$0]  %s253, 16384, %s255, %s243, 256, 256, 16
        $region24: #{tpu_custom_call.1} parent=15 // pred_fallthru
          _
        // Predicated region
        $region25: #{tpu_custom_call.1} parent=15 // pred_check
          %p261 = pneg %p109
        $region26: #{tpu_custom_call.1} parent=15 // pred_check_branch
          %263 = sbr.rel (%p261) target = $region28
        $region27: #{tpu_custom_call.1} parent=15 // pred_region
          %s264 = sand.u32 %s23, 1
          %s265 = scalar_lea.sflag [#allocation6], %s264
          %s266 = sand.u32 %s99, 1
          %s267 = smul.addr %s266, 4
          %s268 = scalar_lea.vmem [#allocation7], %s267
          %270 = vsyncadd %s265, 0
          %s271 = smul.addr %s30, 4
          %s272 = scalar_lea.hbm %s2, %s271
          %s274 = sshll.u32 %s272, 4
          %s275 = int_to_ptr.hbm [resolvable:$true] %s274
          %s276 = sshll.u32 %s268, 4
          %s277 = int_to_ptr.vmem [resolvable:$true] %s276
          %279 = dma.hbm_to_vmem [thread:$0]  %s275, 64, %s277, %s265
        $region28: #{tpu_custom_call.1} parent=15 // pred_fallthru
          _
        // Predicated region
        $region29: #{tpu_custom_call.1} parent=15 // pred_check
          %p280 = pneg %p135
        $region30: #{tpu_custom_call.1} parent=15 // pred_check_branch
          %282 = sbr.rel (%p280) target = $region32
        $region31: #{tpu_custom_call.1} parent=15 // pred_region
          %s283 = sand.u32 %s23, 1
          %s284 = scalar_lea.sflag [#allocation9], %s283
          %s285 = sand.u32 %s125, 1
          %s286 = smul.addr %s285, 4
          %s287 = scalar_lea.vmem [#allocation8], %s286
          %289 = vsyncadd %s284, 0
          %s290 = smul.addr %s30, 4
          %s291 = scalar_lea.hbm %s3, %s290
          %s293 = sshll.u32 %s291, 4
          %s294 = int_to_ptr.hbm [resolvable:$true] %s293
          %s295 = sshll.u32 %s287, 4
          %s296 = int_to_ptr.vmem [resolvable:$true] %s295
          %298 = dma.hbm_to_vmem [thread:$0]  %s294, 64, %s296, %s284
        $region32: #{tpu_custom_call.1} parent=15 // pred_fallthru
          _
        // Predicated region
        $region33: #{tpu_custom_call.1} parent=15 // pred_check
          %p299 = pneg %p161
        $region34: #{tpu_custom_call.1} parent=15 // pred_check_branch
          %301 = sbr.rel (%p299) target = $region36
        $region35: #{tpu_custom_call.1} parent=15 // pred_region
          %s302 = sand.u32 %s23, 1
          %s303 = scalar_lea.sflag [#allocation9], %s302
          %s304 = sand.u32 %s151, 1
          %s305 = smul.addr %s304, 4
          %s306 = scalar_lea.vmem [#allocation10], %s305
          %308 = vsyncadd %s303, 0
          %s309 = smul.addr %s30, 4
          %s310 = scalar_lea.hbm %s4, %s309
          %s312 = sshll.u32 %s310, 4
          %s313 = int_to_ptr.hbm [resolvable:$true] %s312
          %s314 = sshll.u32 %s306, 4
          %s315 = int_to_ptr.vmem [resolvable:$true] %s314
          %317 = dma.hbm_to_vmem [thread:$0]  %s313, 64, %s315, %s303
        $region36: #{tpu_custom_call.1} parent=15 // pred_fallthru
          _
      $region16: #{tpu_custom_call.1} parent=5 // pred_fallthru
        _
      %p318 = scmp.le.s32.totalorder 1, %s23
      %p319 = scmp.lt.s32.totalorder %s23, 3
      %p320 = pnand %p318, %p319
      %p321 = pneg %p320
      // Predicated region
      $region37: #{tpu_custom_call.1} parent=5 // pred_check
        _
      $region38: #{tpu_custom_call.1} parent=5 // pred_check_branch
        %323 = sbr.rel (%p320) target = $region40
      $region39: #{tpu_custom_call.1} parent=5 // pred_region
        %s324 = ssub.s32 %s23, 1
        %s325 = sand.u32 %s50, 1
        %s326 = scalar_lea.sflag [#allocation3], %s325
        %s327 = sand.u32 %s50, 1
        %s328 = smul.addr %s327, 128
        %s329 = scalar_lea.vmem [#allocation2], %s328
        // Predicated region
        $region41: #{tpu_custom_call.1} parent=39 // pred_check
          %p330 = pneg %p63
        $region42: #{tpu_custom_call.1} parent=39 // pred_check_branch
          %332 = sbr.rel (%p330) target = $region44
        $region43: #{tpu_custom_call.1} parent=39 // pred_region
          %334 = dma.done %s326, 2048
        $region44: #{tpu_custom_call.1} parent=39 // pred_fallthru
          _
        %s335 = sand.u32 %s28, 1
        %s336 = scalar_lea.sflag [#allocation6], %s335
        %s337 = sand.u32 %s76, 1
        %s338 = smul.addr %s337, 1024
        %s339 = scalar_lea.vmem [#allocation5], %s338
        // Predicated region
        $region45: #{tpu_custom_call.1} parent=39 // pred_check
          %p340 = pneg %p89
        $region46: #{tpu_custom_call.1} parent=39 // pred_check_branch
          %342 = sbr.rel (%p340) target = $region48
        $region47: #{tpu_custom_call.1} parent=39 // pred_region
          %344 = dma.done %s336, 16384
        $region48: #{tpu_custom_call.1} parent=39 // pred_fallthru
          _
        %s345 = sand.u32 %s28, 1
        %s346 = scalar_lea.sflag [#allocation6], %s345
        %s347 = sand.u32 %s102, 1
        %s348 = smul.addr %s347, 4
        %s349 = scalar_lea.vmem [#allocation7], %s348
        // Predicated region
        $region49: #{tpu_custom_call.1} parent=39 // pred_check
          %p350 = pneg %p115
        $region50: #{tpu_custom_call.1} parent=39 // pred_check_branch
          %352 = sbr.rel (%p350) target = $region52
        $region51: #{tpu_custom_call.1} parent=39 // pred_region
          %354 = dma.done %s346, 64
        $region52: #{tpu_custom_call.1} parent=39 // pred_fallthru
          _
        %s355 = sand.u32 %s28, 1
        %s356 = scalar_lea.sflag [#allocation9], %s355
        %s357 = sand.u32 %s128, 1
        %s358 = smul.addr %s357, 4
        %s359 = scalar_lea.vmem [#allocation8], %s358
        // Predicated region
        $region53: #{tpu_custom_call.1} parent=39 // pred_check
          %p360 = pneg %p141
        $region54: #{tpu_custom_call.1} parent=39 // pred_check_branch
          %362 = sbr.rel (%p360) target = $region56
        $region55: #{tpu_custom_call.1} parent=39 // pred_region
          %364 = dma.done %s356, 64
        $region56: #{tpu_custom_call.1} parent=39 // pred_fallthru
          _
        %s365 = sand.u32 %s28, 1
        %s366 = scalar_lea.sflag [#allocation9], %s365
        %s367 = sand.u32 %s154, 1
        %s368 = smul.addr %s367, 4
        %s369 = scalar_lea.vmem [#allocation10], %s368
        // Predicated region
        $region57: #{tpu_custom_call.1} parent=39 // pred_check
          %p370 = pneg %p167
        $region58: #{tpu_custom_call.1} parent=39 // pred_check_branch
          %372 = sbr.rel (%p370) target = $region60
        $region59: #{tpu_custom_call.1} parent=39 // pred_region
          %374 = dma.done %s366, 64
        $region60: #{tpu_custom_call.1} parent=39 // pred_fallthru
          _
        %s375 = sand.u32 %s50, 1
        %s376 = scalar_lea.sflag [#allocation3], %s375
        %s377 = sand.u32 %s50, 1
        %s378 = smul.addr %s377, 128
        %s379 = scalar_lea.vmem [#allocation2], %s378
        %p380 = pneg %p63
        %p381 = pneg %p60
        %s382 = sand.u32 %s28, 1
        %s383 = scalar_lea.sflag [#allocation6], %s382
        %s384 = sand.u32 %s76, 1
        %s385 = smul.addr %s384, 1024
        %s386 = scalar_lea.vmem [#allocation5], %s385
        %p387 = pneg %p89
        %p388 = pneg %p86
        %s389 = sand.u32 %s28, 1
        %s390 = scalar_lea.sflag [#allocation6], %s389
        %s391 = sand.u32 %s102, 1
        %s392 = smul.addr %s391, 4
        %s393 = scalar_lea.vmem [#allocation7], %s392
        %p394 = pneg %p115
        %p395 = pneg %p112
        %s396 = sand.u32 %s28, 1
        %s397 = scalar_lea.sflag [#allocation9], %s396
        %s398 = sand.u32 %s128, 1
        %s399 = smul.addr %s398, 4
        %s400 = scalar_lea.vmem [#allocation8], %s399
        %p401 = pneg %p141
        %p402 = pneg %p138
        %s403 = sand.u32 %s28, 1
        %s404 = scalar_lea.sflag [#allocation9], %s403
        %s405 = sand.u32 %s154, 1
        %s406 = smul.addr %s405, 4
        %s407 = scalar_lea.vmem [#allocation10], %s406
        %p408 = pneg %p167
        %p409 = pneg %p164
        %p410 = pneg %p195
        %p411 = pneg %p192
        %s412 = sand.u32 %s182, 1
        %s413 = scalar_lea.sflag [#allocation4], %s412
        %s414 = sand.u32 %s182, 1
        %s415 = smul.addr %s414, 128
        %s416 = scalar_lea.vmem [#allocation11], %s415
        %s417 = smul.u32 4, %s33
        %s418 = smul.u32 4, %s33
        %v419 = vld [vmem:[%s329] sm:$0xff]
        %v420 = vld [vmem:[%s329 + $0x8] sm:$0xff]
        %v421 = vld [vmem:[%s329 + $0x10] sm:$0xff]
        %v422 = vld [vmem:[%s329 + $0x18] sm:$0xff]
        %v423 = vld [vmem:[%s329 + $0x20] sm:$0xff]
        %v424 = vld [vmem:[%s329 + $0x28] sm:$0xff]
        %v425 = vld [vmem:[%s329 + $0x30] sm:$0xff]
        %v426 = vld [vmem:[%s329 + $0x38] sm:$0xff]
        %v427 = vld [vmem:[%s329 + $0x40] sm:$0xff]
        %v428 = vld [vmem:[%s329 + $0x48] sm:$0xff]
        %v429 = vld [vmem:[%s329 + $0x50] sm:$0xff]
        %v430 = vld [vmem:[%s329 + $0x58] sm:$0xff]
        %v431 = vld [vmem:[%s329 + $0x60] sm:$0xff]
        %v432 = vld [vmem:[%s329 + $0x68] sm:$0xff]
        %v433 = vld [vmem:[%s329 + $0x70] sm:$0xff]
        %v434 = vld [vmem:[%s329 + $0x78] sm:$0xff]
        %v435 = vpack.c.bf16 %v423, %v419
        %v436 = vpack.c.bf16 %v424, %v420
        %v437 = vpack.c.bf16 %v425, %v421
        %v438 = vpack.c.bf16 %v426, %v422
        %v439 = vpack.c.bf16 %v431, %v427
        %v440 = vpack.c.bf16 %v432, %v428
        %v441 = vpack.c.bf16 %v433, %v429
        %v442 = vpack.c.bf16 %v434, %v430
        %v443 = vld [vmem:[%s339] sm:$0xff]
        %v444 = vld [vmem:[%s339 + $0x8] sm:$0xff]
        %v445 = vld [vmem:[%s339 + $0x10] sm:$0xff]
        %v446 = vld [vmem:[%s339 + $0x18] sm:$0xff]
        %v447 = vld [vmem:[%s339 + $0x20] sm:$0xff]
        %v448 = vld [vmem:[%s339 + $0x28] sm:$0xff]
        %v449 = vld [vmem:[%s339 + $0x30] sm:$0xff]
        %v450 = vld [vmem:[%s339 + $0x38] sm:$0xff]
        %v451 = vld [vmem:[%s339 + $0x40] sm:$0xff]
        %v452 = vld [vmem:[%s339 + $0x48] sm:$0xff]
        %v453 = vld [vmem:[%s339 + $0x50] sm:$0xff]
        %v454 = vld [vmem:[%s339 + $0x58] sm:$0xff]
        %v455 = vld [vmem:[%s339 + $0x60] sm:$0xff]
        %v456 = vld [vmem:[%s339 + $0x68] sm:$0xff]
        %v457 = vld [vmem:[%s339 + $0x70] sm:$0xff]
        %v458 = vld [vmem:[%s339 + $0x78] sm:$0xff]
        %v459 = vld [vmem:[%s339 + $0x80] sm:$0xff]
        %v460 = vld [vmem:[%s339 + $0x88] sm:$0xff]
        %v461 = vld [vmem:[%s339 + $0x90] sm:$0xff]
        %v462 = vld [vmem:[%s339 + $0x98] sm:$0xff]
        %v463 = vld [vmem:[%s339 + $0xa0] sm:$0xff]
        %v464 = vld [vmem:[%s339 + $0xa8] sm:$0xff]
        %v465 = vld [vmem:[%s339 + $0xb0] sm:$0xff]
        %v466 = vld [vmem:[%s339 + $0xb8] sm:$0xff]
        %v467 = vld [vmem:[%s339 + $0xc0] sm:$0xff]
        %v468 = vld [vmem:[%s339 + $0xc8] sm:$0xff]
        %v469 = vld [vmem:[%s339 + $0xd0] sm:$0xff]
        %v470 = vld [vmem:[%s339 + $0xd8] sm:$0xff]
        %v471 = vld [vmem:[%s339 + $0xe0] sm:$0xff]
        %v472 = vld [vmem:[%s339 + $0xe8] sm:$0xff]
        %v473 = vld [vmem:[%s339 + $0xf0] sm:$0xff]
        %v474 = vld [vmem:[%s339 + $0xf8] sm:$0xff]
        %v475 = vld [vmem:[%s339 + $0x100] sm:$0xff]
        %v476 = vld [vmem:[%s339 + $0x108] sm:$0xff]
        %v477 = vld [vmem:[%s339 + $0x110] sm:$0xff]
        %v478 = vld [vmem:[%s339 + $0x118] sm:$0xff]
        %v479 = vld [vmem:[%s339 + $0x120] sm:$0xff]
        %v480 = vld [vmem:[%s339 + $0x128] sm:$0xff]
        %v481 = vld [vmem:[%s339 + $0x130] sm:$0xff]
        %v482 = vld [vmem:[%s339 + $0x138] sm:$0xff]
        %v483 = vld [vmem:[%s339 + $0x140] sm:$0xff]
        %v484 = vld [vmem:[%s339 + $0x148] sm:$0xff]
        %v485 = vld [vmem:[%s339 + $0x150] sm:$0xff]
        %v486 = vld [vmem:[%s339 + $0x158] sm:$0xff]
        %v487 = vld [vmem:[%s339 + $0x160] sm:$0xff]
        %v488 = vld [vmem:[%s339 + $0x168] sm:$0xff]
        %v489 = vld [vmem:[%s339 + $0x170] sm:$0xff]
        %v490 = vld [vmem:[%s339 + $0x178] sm:$0xff]
        %v491 = vld [vmem:[%s339 + $0x180] sm:$0xff]
        %v492 = vld [vmem:[%s339 + $0x188] sm:$0xff]
        %v493 = vld [vmem:[%s339 + $0x190] sm:$0xff]
        %v494 = vld [vmem:[%s339 + $0x198] sm:$0xff]
        %v495 = vld [vmem:[%s339 + $0x1a0] sm:$0xff]
        %v496 = vld [vmem:[%s339 + $0x1a8] sm:$0xff]
        %v497 = vld [vmem:[%s339 + $0x1b0] sm:$0xff]
        %v498 = vld [vmem:[%s339 + $0x1b8] sm:$0xff]
        %v499 = vld [vmem:[%s339 + $0x1c0] sm:$0xff]
        %v500 = vld [vmem:[%s339 + $0x1c8] sm:$0xff]
        %v501 = vld [vmem:[%s339 + $0x1d0] sm:$0xff]
        %v502 = vld [vmem:[%s339 + $0x1d8] sm:$0xff]
        %v503 = vld [vmem:[%s339 + $0x1e0] sm:$0xff]
        %v504 = vld [vmem:[%s339 + $0x1e8] sm:$0xff]
        %v505 = vld [vmem:[%s339 + $0x1f0] sm:$0xff]
        %v506 = vld [vmem:[%s339 + $0x1f8] sm:$0xff]
        %v507 = vld [vmem:[%s339 + $0x200] sm:$0xff]
        %v508 = vld [vmem:[%s339 + $0x208] sm:$0xff]
        %v509 = vld [vmem:[%s339 + $0x210] sm:$0xff]
        %v510 = vld [vmem:[%s339 + $0x218] sm:$0xff]
        %v511 = vld [vmem:[%s339 + $0x220] sm:$0xff]
        %v512 = vld [vmem:[%s339 + $0x228] sm:$0xff]
        %v513 = vld [vmem:[%s339 + $0x230] sm:$0xff]
        %v514 = vld [vmem:[%s339 + $0x238] sm:$0xff]
        %v515 = vld [vmem:[%s339 + $0x240] sm:$0xff]
        %v516 = vld [vmem:[%s339 + $0x248] sm:$0xff]
        %v517 = vld [vmem:[%s339 + $0x250] sm:$0xff]
        %v518 = vld [vmem:[%s339 + $0x258] sm:$0xff]
        %v519 = vld [vmem:[%s339 + $0x260] sm:$0xff]
        %v520 = vld [vmem:[%s339 + $0x268] sm:$0xff]
        %v521 = vld [vmem:[%s339 + $0x270] sm:$0xff]
        %v522 = vld [vmem:[%s339 + $0x278] sm:$0xff]
        %v523 = vld [vmem:[%s339 + $0x280] sm:$0xff]
        %v524 = vld [vmem:[%s339 + $0x288] sm:$0xff]
        %v525 = vld [vmem:[%s339 + $0x290] sm:$0xff]
        %v526 = vld [vmem:[%s339 + $0x298] sm:$0xff]
        %v527 = vld [vmem:[%s339 + $0x2a0] sm:$0xff]
        %v528 = vld [vmem:[%s339 + $0x2a8] sm:$0xff]
        %v529 = vld [vmem:[%s339 + $0x2b0] sm:$0xff]
        %v530 = vld [vmem:[%s339 + $0x2b8] sm:$0xff]
        %v531 = vld [vmem:[%s339 + $0x2c0] sm:$0xff]
        %v532 = vld [vmem:[%s339 + $0x2c8] sm:$0xff]
        %v533 = vld [vmem:[%s339 + $0x2d0] sm:$0xff]
        %v534 = vld [vmem:[%s339 + $0x2d8] sm:$0xff]
        %v535 = vld [vmem:[%s339 + $0x2e0] sm:$0xff]
        %v536 = vld [vmem:[%s339 + $0x2e8] sm:$0xff]
        %v537 = vld [vmem:[%s339 + $0x2f0] sm:$0xff]
        %v538 = vld [vmem:[%s339 + $0x2f8] sm:$0xff]
        %v539 = vld [vmem:[%s339 + $0x300] sm:$0xff]
        %v540 = vld [vmem:[%s339 + $0x308] sm:$0xff]
        %v541 = vld [vmem:[%s339 + $0x310] sm:$0xff]
        %v542 = vld [vmem:[%s339 + $0x318] sm:$0xff]
        %v543 = vld [vmem:[%s339 + $0x320] sm:$0xff]
        %v544 = vld [vmem:[%s339 + $0x328] sm:$0xff]
        %v545 = vld [vmem:[%s339 + $0x330] sm:$0xff]
        %v546 = vld [vmem:[%s339 + $0x338] sm:$0xff]
        %v547 = vld [vmem:[%s339 + $0x340] sm:$0xff]
        %v548 = vld [vmem:[%s339 + $0x348] sm:$0xff]
        %v549 = vld [vmem:[%s339 + $0x350] sm:$0xff]
        %v550 = vld [vmem:[%s339 + $0x358] sm:$0xff]
        %v551 = vld [vmem:[%s339 + $0x360] sm:$0xff]
        %v552 = vld [vmem:[%s339 + $0x368] sm:$0xff]
        %v553 = vld [vmem:[%s339 + $0x370] sm:$0xff]
        %v554 = vld [vmem:[%s339 + $0x378] sm:$0xff]
        %v555 = vld [vmem:[%s339 + $0x380] sm:$0xff]
        %v556 = vld [vmem:[%s339 + $0x388] sm:$0xff]
        %v557 = vld [vmem:[%s339 + $0x390] sm:$0xff]
        %v558 = vld [vmem:[%s339 + $0x398] sm:$0xff]
        %v559 = vld [vmem:[%s339 + $0x3a0] sm:$0xff]
        %v560 = vld [vmem:[%s339 + $0x3a8] sm:$0xff]
        %v561 = vld [vmem:[%s339 + $0x3b0] sm:$0xff]
        %v562 = vld [vmem:[%s339 + $0x3b8] sm:$0xff]
        %v563 = vld [vmem:[%s339 + $0x3c0] sm:$0xff]
        %v564 = vld [vmem:[%s339 + $0x3c8] sm:$0xff]
        %v565 = vld [vmem:[%s339 + $0x3d0] sm:$0xff]
        %v566 = vld [vmem:[%s339 + $0x3d8] sm:$0xff]
        %v567 = vld [vmem:[%s339 + $0x3e0] sm:$0xff]
        %v568 = vld [vmem:[%s339 + $0x3e8] sm:$0xff]
        %v569 = vld [vmem:[%s339 + $0x3f0] sm:$0xff]
        %v570 = vld [vmem:[%s339 + $0x3f8] sm:$0xff]
        %v571 = vld [vmem:[%s349] sm:$0xf]
        %v573 = vperm.slane %v571, 0
        %v574 = vperm.slane %v571, 1
        %v575 = vperm.slane %v571, 2
        %v576 = vperm.slane %v571, 3
        %v709 = vunpack.c.l.b16 %v443
        %v710 = vunpack.c.h.b16 %v443
        %v711 = vunpack.c.l.b16 %v444
        %v712 = vunpack.c.h.b16 %v444
        %v713 = vunpack.c.l.b16 %v445
        %v714 = vunpack.c.h.b16 %v445
        %v715 = vunpack.c.l.b16 %v446
        %v716 = vunpack.c.h.b16 %v446
        %v717 = vunpack.c.l.b16 %v447
        %v718 = vunpack.c.h.b16 %v447
        %v719 = vunpack.c.l.b16 %v448
        %v720 = vunpack.c.h.b16 %v448
        %v721 = vunpack.c.l.b16 %v449
        %v722 = vunpack.c.h.b16 %v449
        %v723 = vunpack.c.l.b16 %v450
        %v724 = vunpack.c.h.b16 %v450
        %v725 = vunpack.c.l.b16 %v451
        %v726 = vunpack.c.h.b16 %v451
        %v727 = vunpack.c.l.b16 %v452
        %v728 = vunpack.c.h.b16 %v452
        %v729 = vunpack.c.l.b16 %v453
        %v730 = vunpack.c.h.b16 %v453
        %v731 = vunpack.c.l.b16 %v454
        %v732 = vunpack.c.h.b16 %v454
        %v733 = vunpack.c.l.b16 %v455
        %v734 = vunpack.c.h.b16 %v455
        %v735 = vunpack.c.l.b16 %v456
        %v736 = vunpack.c.h.b16 %v456
        %v737 = vunpack.c.l.b16 %v457
        %v738 = vunpack.c.h.b16 %v457
        %v739 = vunpack.c.l.b16 %v458
        %v740 = vunpack.c.h.b16 %v458
        %v741 = vunpack.c.l.b16 %v459
        %v742 = vunpack.c.h.b16 %v459
        %v743 = vunpack.c.l.b16 %v460
        %v744 = vunpack.c.h.b16 %v460
        %v745 = vunpack.c.l.b16 %v461
        %v746 = vunpack.c.h.b16 %v461
        %v747 = vunpack.c.l.b16 %v462
        %v748 = vunpack.c.h.b16 %v462
        %v749 = vunpack.c.l.b16 %v463
        %v750 = vunpack.c.h.b16 %v463
        %v751 = vunpack.c.l.b16 %v464
        %v752 = vunpack.c.h.b16 %v464
        %v753 = vunpack.c.l.b16 %v465
        %v754 = vunpack.c.h.b16 %v465
        %v755 = vunpack.c.l.b16 %v466
        %v756 = vunpack.c.h.b16 %v466
        %v757 = vunpack.c.l.b16 %v467
        %v758 = vunpack.c.h.b16 %v467
        %v759 = vunpack.c.l.b16 %v468
        %v760 = vunpack.c.h.b16 %v468
        %v761 = vunpack.c.l.b16 %v469
        %v762 = vunpack.c.h.b16 %v469
        %v763 = vunpack.c.l.b16 %v470
        %v764 = vunpack.c.h.b16 %v470
        %v765 = vunpack.c.l.b16 %v471
        %v766 = vunpack.c.h.b16 %v471
        %v767 = vunpack.c.l.b16 %v472
        %v768 = vunpack.c.h.b16 %v472
        %v769 = vunpack.c.l.b16 %v473
        %v770 = vunpack.c.h.b16 %v473
        %v771 = vunpack.c.l.b16 %v474
        %v772 = vunpack.c.h.b16 %v474
        %v773 = vunpack.c.l.b16 %v475
        %v774 = vunpack.c.h.b16 %v475
        %v775 = vunpack.c.l.b16 %v476
        %v776 = vunpack.c.h.b16 %v476
        %v777 = vunpack.c.l.b16 %v477
        %v778 = vunpack.c.h.b16 %v477
        %v779 = vunpack.c.l.b16 %v478
        %v780 = vunpack.c.h.b16 %v478
        %v781 = vunpack.c.l.b16 %v479
        %v782 = vunpack.c.h.b16 %v479
        %v783 = vunpack.c.l.b16 %v480
        %v784 = vunpack.c.h.b16 %v480
        %v785 = vunpack.c.l.b16 %v481
        %v786 = vunpack.c.h.b16 %v481
        %v787 = vunpack.c.l.b16 %v482
        %v788 = vunpack.c.h.b16 %v482
        %v789 = vunpack.c.l.b16 %v483
        %v790 = vunpack.c.h.b16 %v483
        %v791 = vunpack.c.l.b16 %v484
        %v792 = vunpack.c.h.b16 %v484
        %v793 = vunpack.c.l.b16 %v485
        %v794 = vunpack.c.h.b16 %v485
        %v795 = vunpack.c.l.b16 %v486
        %v796 = vunpack.c.h.b16 %v486
        %v797 = vunpack.c.l.b16 %v487
        %v798 = vunpack.c.h.b16 %v487
        %v799 = vunpack.c.l.b16 %v488
        %v800 = vunpack.c.h.b16 %v488
        %v801 = vunpack.c.l.b16 %v489
        %v802 = vunpack.c.h.b16 %v489
        %v803 = vunpack.c.l.b16 %v490
        %v804 = vunpack.c.h.b16 %v490
        %v805 = vunpack.c.l.b16 %v491
        %v806 = vunpack.c.h.b16 %v491
        %v807 = vunpack.c.l.b16 %v492
        %v808 = vunpack.c.h.b16 %v492
        %v809 = vunpack.c.l.b16 %v493
        %v810 = vunpack.c.h.b16 %v493
        %v811 = vunpack.c.l.b16 %v494
        %v812 = vunpack.c.h.b16 %v494
        %v813 = vunpack.c.l.b16 %v495
        %v814 = vunpack.c.h.b16 %v495
        %v815 = vunpack.c.l.b16 %v496
        %v816 = vunpack.c.h.b16 %v496
        %v817 = vunpack.c.l.b16 %v497
        %v818 = vunpack.c.h.b16 %v497
        %v819 = vunpack.c.l.b16 %v498
        %v820 = vunpack.c.h.b16 %v498
        %v821 = vunpack.c.l.b16 %v499
        %v822 = vunpack.c.h.b16 %v499
        %v823 = vunpack.c.l.b16 %v500
        %v824 = vunpack.c.h.b16 %v500
        %v825 = vunpack.c.l.b16 %v501
        %v826 = vunpack.c.h.b16 %v501
        %v827 = vunpack.c.l.b16 %v502
        %v828 = vunpack.c.h.b16 %v502
        %v829 = vunpack.c.l.b16 %v503
        %v830 = vunpack.c.h.b16 %v503
        %v831 = vunpack.c.l.b16 %v504
        %v832 = vunpack.c.h.b16 %v504
        %v833 = vunpack.c.l.b16 %v505
        %v834 = vunpack.c.h.b16 %v505
        %v835 = vunpack.c.l.b16 %v506
        %v836 = vunpack.c.h.b16 %v506
        %v837 = vunpack.c.l.b16 %v507
        %v838 = vunpack.c.h.b16 %v507
        %v839 = vunpack.c.l.b16 %v508
        %v840 = vunpack.c.h.b16 %v508
        %v841 = vunpack.c.l.b16 %v509
        %v842 = vunpack.c.h.b16 %v509
        %v843 = vunpack.c.l.b16 %v510
        %v844 = vunpack.c.h.b16 %v510
        %v845 = vunpack.c.l.b16 %v511
        %v846 = vunpack.c.h.b16 %v511
        %v847 = vunpack.c.l.b16 %v512
        %v848 = vunpack.c.h.b16 %v512
        %v849 = vunpack.c.l.b16 %v513
        %v850 = vunpack.c.h.b16 %v513
        %v851 = vunpack.c.l.b16 %v514
        %v852 = vunpack.c.h.b16 %v514
        %v853 = vunpack.c.l.b16 %v515
        %v854 = vunpack.c.h.b16 %v515
        %v855 = vunpack.c.l.b16 %v516
        %v856 = vunpack.c.h.b16 %v516
        %v857 = vunpack.c.l.b16 %v517
        %v858 = vunpack.c.h.b16 %v517
        %v859 = vunpack.c.l.b16 %v518
        %v860 = vunpack.c.h.b16 %v518
        %v861 = vunpack.c.l.b16 %v519
        %v862 = vunpack.c.h.b16 %v519
        %v863 = vunpack.c.l.b16 %v520
        %v864 = vunpack.c.h.b16 %v520
        %v865 = vunpack.c.l.b16 %v521
        %v866 = vunpack.c.h.b16 %v521
        %v867 = vunpack.c.l.b16 %v522
        %v868 = vunpack.c.h.b16 %v522
        %v869 = vunpack.c.l.b16 %v523
        %v870 = vunpack.c.h.b16 %v523
        %v871 = vunpack.c.l.b16 %v524
        %v872 = vunpack.c.h.b16 %v524
        %v873 = vunpack.c.l.b16 %v525
        %v874 = vunpack.c.h.b16 %v525
        %v875 = vunpack.c.l.b16 %v526
        %v876 = vunpack.c.h.b16 %v526
        %v877 = vunpack.c.l.b16 %v527
        %v878 = vunpack.c.h.b16 %v527
        %v879 = vunpack.c.l.b16 %v528
        %v880 = vunpack.c.h.b16 %v528
        %v881 = vunpack.c.l.b16 %v529
        %v882 = vunpack.c.h.b16 %v529
        %v883 = vunpack.c.l.b16 %v530
        %v884 = vunpack.c.h.b16 %v530
        %v885 = vunpack.c.l.b16 %v531
        %v886 = vunpack.c.h.b16 %v531
        %v887 = vunpack.c.l.b16 %v532
        %v888 = vunpack.c.h.b16 %v532
        %v889 = vunpack.c.l.b16 %v533
        %v890 = vunpack.c.h.b16 %v533
        %v891 = vunpack.c.l.b16 %v534
        %v892 = vunpack.c.h.b16 %v534
        %v893 = vunpack.c.l.b16 %v535
        %v894 = vunpack.c.h.b16 %v535
        %v895 = vunpack.c.l.b16 %v536
        %v896 = vunpack.c.h.b16 %v536
        %v897 = vunpack.c.l.b16 %v537
        %v898 = vunpack.c.h.b16 %v537
        %v899 = vunpack.c.l.b16 %v538
        %v900 = vunpack.c.h.b16 %v538
        %v901 = vunpack.c.l.b16 %v539
        %v902 = vunpack.c.h.b16 %v539
        %v903 = vunpack.c.l.b16 %v540
        %v904 = vunpack.c.h.b16 %v540
        %v905 = vunpack.c.l.b16 %v541
        %v906 = vunpack.c.h.b16 %v541
        %v907 = vunpack.c.l.b16 %v542
        %v908 = vunpack.c.h.b16 %v542
        %v909 = vunpack.c.l.b16 %v543
        %v910 = vunpack.c.h.b16 %v543
        %v911 = vunpack.c.l.b16 %v544
        %v912 = vunpack.c.h.b16 %v544
        %v913 = vunpack.c.l.b16 %v545
        %v914 = vunpack.c.h.b16 %v545
        %v915 = vunpack.c.l.b16 %v546
        %v916 = vunpack.c.h.b16 %v546
        %v917 = vunpack.c.l.b16 %v547
        %v918 = vunpack.c.h.b16 %v547
        %v919 = vunpack.c.l.b16 %v548
        %v920 = vunpack.c.h.b16 %v548
        %v921 = vunpack.c.l.b16 %v549
        %v922 = vunpack.c.h.b16 %v549
        %v923 = vunpack.c.l.b16 %v550
        %v924 = vunpack.c.h.b16 %v550
        %v925 = vunpack.c.l.b16 %v551
        %v926 = vunpack.c.h.b16 %v551
        %v927 = vunpack.c.l.b16 %v552
        %v928 = vunpack.c.h.b16 %v552
        %v929 = vunpack.c.l.b16 %v553
        %v930 = vunpack.c.h.b16 %v553
        %v931 = vunpack.c.l.b16 %v554
        %v932 = vunpack.c.h.b16 %v554
        %v933 = vunpack.c.l.b16 %v555
        %v934 = vunpack.c.h.b16 %v555
        %v935 = vunpack.c.l.b16 %v556
        %v936 = vunpack.c.h.b16 %v556
        %v937 = vunpack.c.l.b16 %v557
        %v938 = vunpack.c.h.b16 %v557
        %v939 = vunpack.c.l.b16 %v558
        %v940 = vunpack.c.h.b16 %v558
        %v941 = vunpack.c.l.b16 %v559
        %v942 = vunpack.c.h.b16 %v559
        %v943 = vunpack.c.l.b16 %v560
        %v944 = vunpack.c.h.b16 %v560
        %v945 = vunpack.c.l.b16 %v561
        %v946 = vunpack.c.h.b16 %v561
        %v947 = vunpack.c.l.b16 %v562
        %v948 = vunpack.c.h.b16 %v562
        %v949 = vunpack.c.l.b16 %v563
        %v950 = vunpack.c.h.b16 %v563
        %v951 = vunpack.c.l.b16 %v564
        %v952 = vunpack.c.h.b16 %v564
        %v953 = vunpack.c.l.b16 %v565
        %v954 = vunpack.c.h.b16 %v565
        %v955 = vunpack.c.l.b16 %v566
        %v956 = vunpack.c.h.b16 %v566
        %v957 = vunpack.c.l.b16 %v567
        %v958 = vunpack.c.h.b16 %v567
        %v959 = vunpack.c.l.b16 %v568
        %v960 = vunpack.c.h.b16 %v568
        %v961 = vunpack.c.l.b16 %v569
        %v962 = vunpack.c.h.b16 %v569
        %v963 = vunpack.c.l.b16 %v570
        %v964 = vunpack.c.h.b16 %v570
        %v965 = vpack.c.b16 %v713, %v709
        %v966 = vpack.c.b16 %v714, %v710
        %v967 = vpack.c.b16 %v715, %v711
        %v968 = vpack.c.b16 %v716, %v712
        %v969 = vpack.c.b16 %v721, %v717
        %v970 = vpack.c.b16 %v722, %v718
        %v971 = vpack.c.b16 %v723, %v719
        %v972 = vpack.c.b16 %v724, %v720
        %v973 = vpack.c.b16 %v729, %v725
        %v974 = vpack.c.b16 %v730, %v726
        %v975 = vpack.c.b16 %v731, %v727
        %v976 = vpack.c.b16 %v732, %v728
        %v977 = vpack.c.b16 %v737, %v733
        %v978 = vpack.c.b16 %v738, %v734
        %v979 = vpack.c.b16 %v739, %v735
        %v980 = vpack.c.b16 %v740, %v736
        %v981 = vpack.c.b16 %v745, %v741
        %v982 = vpack.c.b16 %v746, %v742
        %v983 = vpack.c.b16 %v747, %v743
        %v984 = vpack.c.b16 %v748, %v744
        %v985 = vpack.c.b16 %v753, %v749
        %v986 = vpack.c.b16 %v754, %v750
        %v987 = vpack.c.b16 %v755, %v751
        %v988 = vpack.c.b16 %v756, %v752
        %v989 = vpack.c.b16 %v761, %v757
        %v990 = vpack.c.b16 %v762, %v758
        %v991 = vpack.c.b16 %v763, %v759
        %v992 = vpack.c.b16 %v764, %v760
        %v993 = vpack.c.b16 %v769, %v765
        %v994 = vpack.c.b16 %v770, %v766
        %v995 = vpack.c.b16 %v771, %v767
        %v996 = vpack.c.b16 %v772, %v768
        %v997 = vpack.c.b16 %v777, %v773
        %v998 = vpack.c.b16 %v778, %v774
        %v999 = vpack.c.b16 %v779, %v775
        %v1000 = vpack.c.b16 %v780, %v776
        %v1001 = vpack.c.b16 %v785, %v781
        %v1002 = vpack.c.b16 %v786, %v782
        %v1003 = vpack.c.b16 %v787, %v783
        %v1004 = vpack.c.b16 %v788, %v784
        %v1005 = vpack.c.b16 %v793, %v789
        %v1006 = vpack.c.b16 %v794, %v790
        %v1007 = vpack.c.b16 %v795, %v791
        %v1008 = vpack.c.b16 %v796, %v792
        %v1009 = vpack.c.b16 %v801, %v797
        %v1010 = vpack.c.b16 %v802, %v798
        %v1011 = vpack.c.b16 %v803, %v799
        %v1012 = vpack.c.b16 %v804, %v800
        %v1013 = vpack.c.b16 %v809, %v805
        %v1014 = vpack.c.b16 %v810, %v806
        %v1015 = vpack.c.b16 %v811, %v807
        %v1016 = vpack.c.b16 %v812, %v808
        %v1017 = vpack.c.b16 %v817, %v813
        %v1018 = vpack.c.b16 %v818, %v814
        %v1019 = vpack.c.b16 %v819, %v815
        %v1020 = vpack.c.b16 %v820, %v816
        %v1021 = vpack.c.b16 %v825, %v821
        %v1022 = vpack.c.b16 %v826, %v822
        %v1023 = vpack.c.b16 %v827, %v823
        %v1024 = vpack.c.b16 %v828, %v824
        %v1025 = vpack.c.b16 %v833, %v829
        %v1026 = vpack.c.b16 %v834, %v830
        %v1027 = vpack.c.b16 %v835, %v831
        %v1028 = vpack.c.b16 %v836, %v832
        %v1029 = vpack.c.b16 %v841, %v837
        %v1030 = vpack.c.b16 %v842, %v838
        %v1031 = vpack.c.b16 %v843, %v839
        %v1032 = vpack.c.b16 %v844, %v840
        %v1033 = vpack.c.b16 %v849, %v845
        %v1034 = vpack.c.b16 %v850, %v846
        %v1035 = vpack.c.b16 %v851, %v847
        %v1036 = vpack.c.b16 %v852, %v848
        %v1037 = vpack.c.b16 %v857, %v853
        %v1038 = vpack.c.b16 %v858, %v854
        %v1039 = vpack.c.b16 %v859, %v855
        %v1040 = vpack.c.b16 %v860, %v856
        %v1041 = vpack.c.b16 %v865, %v861
        %v1042 = vpack.c.b16 %v866, %v862
        %v1043 = vpack.c.b16 %v867, %v863
        %v1044 = vpack.c.b16 %v868, %v864
        %v1045 = vpack.c.b16 %v873, %v869
        %v1046 = vpack.c.b16 %v874, %v870
        %v1047 = vpack.c.b16 %v875, %v871
        %v1048 = vpack.c.b16 %v876, %v872
        %v1049 = vpack.c.b16 %v881, %v877
        %v1050 = vpack.c.b16 %v882, %v878
        %v1051 = vpack.c.b16 %v883, %v879
        %v1052 = vpack.c.b16 %v884, %v880
        %v1053 = vpack.c.b16 %v889, %v885
        %v1054 = vpack.c.b16 %v890, %v886
        %v1055 = vpack.c.b16 %v891, %v887
        %v1056 = vpack.c.b16 %v892, %v888
        %v1057 = vpack.c.b16 %v897, %v893
        %v1058 = vpack.c.b16 %v898, %v894
        %v1059 = vpack.c.b16 %v899, %v895
        %v1060 = vpack.c.b16 %v900, %v896
        %v1061 = vpack.c.b16 %v905, %v901
        %v1062 = vpack.c.b16 %v906, %v902
        %v1063 = vpack.c.b16 %v907, %v903
        %v1064 = vpack.c.b16 %v908, %v904
        %v1065 = vpack.c.b16 %v913, %v909
        %v1066 = vpack.c.b16 %v914, %v910
        %v1067 = vpack.c.b16 %v915, %v911
        %v1068 = vpack.c.b16 %v916, %v912
        %v1069 = vpack.c.b16 %v921, %v917
        %v1070 = vpack.c.b16 %v922, %v918
        %v1071 = vpack.c.b16 %v923, %v919
        %v1072 = vpack.c.b16 %v924, %v920
        %v1073 = vpack.c.b16 %v929, %v925
        %v1074 = vpack.c.b16 %v930, %v926
        %v1075 = vpack.c.b16 %v931, %v927
        %v1076 = vpack.c.b16 %v932, %v928
        %v1077 = vpack.c.b16 %v937, %v933
        %v1078 = vpack.c.b16 %v938, %v934
        %v1079 = vpack.c.b16 %v939, %v935
        %v1080 = vpack.c.b16 %v940, %v936
        %v1081 = vpack.c.b16 %v945, %v941
        %v1082 = vpack.c.b16 %v946, %v942
        %v1083 = vpack.c.b16 %v947, %v943
        %v1084 = vpack.c.b16 %v948, %v944
        %v1085 = vpack.c.b16 %v953, %v949
        %v1086 = vpack.c.b16 %v954, %v950
        %v1087 = vpack.c.b16 %v955, %v951
        %v1088 = vpack.c.b16 %v956, %v952
        %v1089 = vpack.c.b16 %v961, %v957
        %v1090 = vpack.c.b16 %v962, %v958
        %v1091 = vpack.c.b16 %v963, %v959
        %v1092 = vpack.c.b16 %v964, %v960
        %1221 = vmatpush.bf16.msra.mxu0 %v993
        %1222 = vmatpush.bf16.msra.mxu0 %v989
        %1223 = vmatpush.bf16.msra.mxu0 %v985
        %1224 = vmatpush.bf16.msra.mxu0 %v981
        %1225 = vmatpush.bf16.msra.mxu0 %v977
        %1226 = vmatpush.bf16.msra.mxu0 %v973
        %1227 = vmatpush.bf16.msra.mxu0 %v969
        %1228 = vmatpush.bf16.msra.mxu0 %v965
        %1229 = vmatmul.bf16.gmra.mxu0 %v435
        %v1230 = vpop.f32.mrf.mxu0
        %v1231 = vadd.f32 %v573, %v1230
        %v1232 = vpop.f32.mrf.mxu0
        %v1233 = vadd.f32 %v573, %v1232
        %1234 = vmatmul.bf16.gmra.mxu0 %v439
        %v1235 = vpop.f32.mrf.mxu0
        %v1236 = vadd.f32 %v573, %v1235
        %v1237 = vpop.f32.mrf.mxu0
        %v1238 = vadd.f32 %v573, %v1237
        %1239 = vdwg.mxu0
        %1240 = vmatpush.bf16.msra.mxu0 %v1025
        %1241 = vmatpush.bf16.msra.mxu0 %v1021
        %1242 = vmatpush.bf16.msra.mxu0 %v1017
        %1243 = vmatpush.bf16.msra.mxu0 %v1013
        %1244 = vmatpush.bf16.msra.mxu0 %v1009
        %1245 = vmatpush.bf16.msra.mxu0 %v1005
        %1246 = vmatpush.bf16.msra.mxu0 %v1001
        %1247 = vmatpush.bf16.msra.mxu0 %v997
        %1248 = vmatmul.bf16.gmra.mxu0 %v436
        %v1249 = vpop.f32.mrf.mxu0
        %v1250 = vadd.f32 %v1231, %v1249
        %v1251 = vpop.f32.mrf.mxu0
        %v1252 = vadd.f32 %v1233, %v1251
        %1253 = vmatmul.bf16.gmra.mxu0 %v440
        %v1254 = vpop.f32.mrf.mxu0
        %v1255 = vadd.f32 %v1236, %v1254
        %v1256 = vpop.f32.mrf.mxu0
        %v1257 = vadd.f32 %v1238, %v1256
        %1258 = vdwg.mxu0
        %1259 = vmatpush.bf16.msra.mxu0 %v1057
        %1260 = vmatpush.bf16.msra.mxu0 %v1053
        %1261 = vmatpush.bf16.msra.mxu0 %v1049
        %1262 = vmatpush.bf16.msra.mxu0 %v1045
        %1263 = vmatpush.bf16.msra.mxu0 %v1041
        %1264 = vmatpush.bf16.msra.mxu0 %v1037
        %1265 = vmatpush.bf16.msra.mxu0 %v1033
        %1266 = vmatpush.bf16.msra.mxu0 %v1029
        %1267 = vmatmul.bf16.gmra.mxu0 %v437
        %v1268 = vpop.f32.mrf.mxu0
        %v1269 = vadd.f32 %v1250, %v1268
        %v1270 = vpop.f32.mrf.mxu0
        %v1271 = vadd.f32 %v1252, %v1270
        %1272 = vmatmul.bf16.gmra.mxu0 %v441
        %v1273 = vpop.f32.mrf.mxu0
        %v1274 = vadd.f32 %v1255, %v1273
        %v1275 = vpop.f32.mrf.mxu0
        %v1276 = vadd.f32 %v1257, %v1275
        %1277 = vdwg.mxu0
        %1278 = vmatpush.bf16.msra.mxu0 %v1089
        %1279 = vmatpush.bf16.msra.mxu0 %v1085
        %1280 = vmatpush.bf16.msra.mxu0 %v1081
        %1281 = vmatpush.bf16.msra.mxu0 %v1077
        %1282 = vmatpush.bf16.msra.mxu0 %v1073
        %1283 = vmatpush.bf16.msra.mxu0 %v1069
        %1284 = vmatpush.bf16.msra.mxu0 %v1065
        %1285 = vmatpush.bf16.msra.mxu0 %v1061
        %1286 = vmatmul.bf16.gmra.mxu0 %v438
        %v1287 = vpop.f32.mrf.mxu0
        %v1288 = vadd.f32 %v1269, %v1287
        %v1289 = vpop.f32.mrf.mxu0
        %v1290 = vadd.f32 %v1271, %v1289
        %1291 = vmatmul.bf16.gmra.mxu0 %v442
        %v1292 = vpop.f32.mrf.mxu0
        %v1293 = vadd.f32 %v1274, %v1292
        %v1294 = vpop.f32.mrf.mxu0
        %v1295 = vadd.f32 %v1276, %v1294
        %1296 = vdwg.mxu0
        %1297 = vmatpush.bf16.msra.mxu0 %v994
        %1298 = vmatpush.bf16.msra.mxu0 %v990
        %1299 = vmatpush.bf16.msra.mxu0 %v986
        %1300 = vmatpush.bf16.msra.mxu0 %v982
        %1301 = vmatpush.bf16.msra.mxu0 %v978
        %1302 = vmatpush.bf16.msra.mxu0 %v974
        %1303 = vmatpush.bf16.msra.mxu0 %v970
        %1304 = vmatpush.bf16.msra.mxu0 %v966
        %1305 = vmatmul.bf16.gmra.mxu0 %v435
        %v1306 = vpop.f32.mrf.mxu0
        %v1307 = vadd.f32 %v574, %v1306
        %v1308 = vpop.f32.mrf.mxu0
        %v1309 = vadd.f32 %v574, %v1308
        %1310 = vmatmul.bf16.gmra.mxu0 %v439
        %v1311 = vpop.f32.mrf.mxu0
        %v1312 = vadd.f32 %v574, %v1311
        %v1313 = vpop.f32.mrf.mxu0
        %v1314 = vadd.f32 %v574, %v1313
        %1315 = vdwg.mxu0
        %1316 = vmatpush.bf16.msra.mxu0 %v1026
        %1317 = vmatpush.bf16.msra.mxu0 %v1022
        %1318 = vmatpush.bf16.msra.mxu0 %v1018
        %1319 = vmatpush.bf16.msra.mxu0 %v1014
        %1320 = vmatpush.bf16.msra.mxu0 %v1010
        %1321 = vmatpush.bf16.msra.mxu0 %v1006
        %1322 = vmatpush.bf16.msra.mxu0 %v1002
        %1323 = vmatpush.bf16.msra.mxu0 %v998
        %1324 = vmatmul.bf16.gmra.mxu0 %v436
        %v1325 = vpop.f32.mrf.mxu0
        %v1326 = vadd.f32 %v1307, %v1325
        %v1327 = vpop.f32.mrf.mxu0
        %v1328 = vadd.f32 %v1309, %v1327
        %1329 = vmatmul.bf16.gmra.mxu0 %v440
        %v1330 = vpop.f32.mrf.mxu0
        %v1331 = vadd.f32 %v1312, %v1330
        %v1332 = vpop.f32.mrf.mxu0
        %v1333 = vadd.f32 %v1314, %v1332
        %1334 = vdwg.mxu0
        %1335 = vmatpush.bf16.msra.mxu0 %v1058
        %1336 = vmatpush.bf16.msra.mxu0 %v1054
        %1337 = vmatpush.bf16.msra.mxu0 %v1050
        %1338 = vmatpush.bf16.msra.mxu0 %v1046
        %1339 = vmatpush.bf16.msra.mxu0 %v1042
        %1340 = vmatpush.bf16.msra.mxu0 %v1038
        %1341 = vmatpush.bf16.msra.mxu0 %v1034
        %1342 = vmatpush.bf16.msra.mxu0 %v1030
        %1343 = vmatmul.bf16.gmra.mxu0 %v437
        %v1344 = vpop.f32.mrf.mxu0
        %v1345 = vadd.f32 %v1326, %v1344
        %v1346 = vpop.f32.mrf.mxu0
        %v1347 = vadd.f32 %v1328, %v1346
        %1348 = vmatmul.bf16.gmra.mxu0 %v441
        %v1349 = vpop.f32.mrf.mxu0
        %v1350 = vadd.f32 %v1331, %v1349
        %v1351 = vpop.f32.mrf.mxu0
        %v1352 = vadd.f32 %v1333, %v1351
        %1353 = vdwg.mxu0
        %1354 = vmatpush.bf16.msra.mxu0 %v1090
        %1355 = vmatpush.bf16.msra.mxu0 %v1086
        %1356 = vmatpush.bf16.msra.mxu0 %v1082
        %1357 = vmatpush.bf16.msra.mxu0 %v1078
        %1358 = vmatpush.bf16.msra.mxu0 %v1074
        %1359 = vmatpush.bf16.msra.mxu0 %v1070
        %1360 = vmatpush.bf16.msra.mxu0 %v1066
        %1361 = vmatpush.bf16.msra.mxu0 %v1062
        %1362 = vmatmul.bf16.gmra.mxu0 %v438
        %v1363 = vpop.f32.mrf.mxu0
        %v1364 = vadd.f32 %v1345, %v1363
        %v1365 = vpop.f32.mrf.mxu0
        %v1366 = vadd.f32 %v1347, %v1365
        %1367 = vmatmul.bf16.gmra.mxu0 %v442
        %v1368 = vpop.f32.mrf.mxu0
        %v1369 = vadd.f32 %v1350, %v1368
        %v1370 = vpop.f32.mrf.mxu0
        %v1371 = vadd.f32 %v1352, %v1370
        %1372 = vdwg.mxu0
        %1373 = vmatpush.bf16.msra.mxu0 %v995
        %1374 = vmatpush.bf16.msra.mxu0 %v991
        %1375 = vmatpush.bf16.msra.mxu0 %v987
        %1376 = vmatpush.bf16.msra.mxu0 %v983
        %1377 = vmatpush.bf16.msra.mxu0 %v979
        %1378 = vmatpush.bf16.msra.mxu0 %v975
        %1379 = vmatpush.bf16.msra.mxu0 %v971
        %1380 = vmatpush.bf16.msra.mxu0 %v967
        %1381 = vmatmul.bf16.gmra.mxu0 %v435
        %v1382 = vpop.f32.mrf.mxu0
        %v1383 = vadd.f32 %v575, %v1382
        %v1384 = vpop.f32.mrf.mxu0
        %v1385 = vadd.f32 %v575, %v1384
        %1386 = vmatmul.bf16.gmra.mxu0 %v439
        %v1387 = vpop.f32.mrf.mxu0
        %v1388 = vadd.f32 %v575, %v1387
        %v1389 = vpop.f32.mrf.mxu0
        %v1390 = vadd.f32 %v575, %v1389
        %1391 = vdwg.mxu0
        %1392 = vmatpush.bf16.msra.mxu0 %v1027
        %1393 = vmatpush.bf16.msra.mxu0 %v1023
        %1394 = vmatpush.bf16.msra.mxu0 %v1019
        %1395 = vmatpush.bf16.msra.mxu0 %v1015
        %1396 = vmatpush.bf16.msra.mxu0 %v1011
        %1397 = vmatpush.bf16.msra.mxu0 %v1007
        %1398 = vmatpush.bf16.msra.mxu0 %v1003
        %1399 = vmatpush.bf16.msra.mxu0 %v999
        %1400 = vmatmul.bf16.gmra.mxu0 %v436
        %v1401 = vpop.f32.mrf.mxu0
        %v1402 = vadd.f32 %v1383, %v1401
        %v1403 = vpop.f32.mrf.mxu0
        %v1404 = vadd.f32 %v1385, %v1403
        %1405 = vmatmul.bf16.gmra.mxu0 %v440
        %v1406 = vpop.f32.mrf.mxu0
        %v1407 = vadd.f32 %v1388, %v1406
        %v1408 = vpop.f32.mrf.mxu0
        %v1409 = vadd.f32 %v1390, %v1408
        %1410 = vdwg.mxu0
        %1411 = vmatpush.bf16.msra.mxu0 %v1059
        %1412 = vmatpush.bf16.msra.mxu0 %v1055
        %1413 = vmatpush.bf16.msra.mxu0 %v1051
        %1414 = vmatpush.bf16.msra.mxu0 %v1047
        %1415 = vmatpush.bf16.msra.mxu0 %v1043
        %1416 = vmatpush.bf16.msra.mxu0 %v1039
        %1417 = vmatpush.bf16.msra.mxu0 %v1035
        %1418 = vmatpush.bf16.msra.mxu0 %v1031
        %1419 = vmatmul.bf16.gmra.mxu0 %v437
        %v1420 = vpop.f32.mrf.mxu0
        %v1421 = vadd.f32 %v1402, %v1420
        %v1422 = vpop.f32.mrf.mxu0
        %v1423 = vadd.f32 %v1404, %v1422
        %1424 = vmatmul.bf16.gmra.mxu0 %v441
        %v1425 = vpop.f32.mrf.mxu0
        %v1426 = vadd.f32 %v1407, %v1425
        %v1427 = vpop.f32.mrf.mxu0
        %v1428 = vadd.f32 %v1409, %v1427
        %1429 = vdwg.mxu0
        %1430 = vmatpush.bf16.msra.mxu0 %v1091
        %1431 = vmatpush.bf16.msra.mxu0 %v1087
        %1432 = vmatpush.bf16.msra.mxu0 %v1083
        %1433 = vmatpush.bf16.msra.mxu0 %v1079
        %1434 = vmatpush.bf16.msra.mxu0 %v1075
        %1435 = vmatpush.bf16.msra.mxu0 %v1071
        %1436 = vmatpush.bf16.msra.mxu0 %v1067
        %1437 = vmatpush.bf16.msra.mxu0 %v1063
        %1438 = vmatmul.bf16.gmra.mxu0 %v438
        %v1439 = vpop.f32.mrf.mxu0
        %v1440 = vadd.f32 %v1421, %v1439
        %v1441 = vpop.f32.mrf.mxu0
        %v1442 = vadd.f32 %v1423, %v1441
        %1443 = vmatmul.bf16.gmra.mxu0 %v442
        %v1444 = vpop.f32.mrf.mxu0
        %v1445 = vadd.f32 %v1426, %v1444
        %v1446 = vpop.f32.mrf.mxu0
        %v1447 = vadd.f32 %v1428, %v1446
        %1448 = vdwg.mxu0
        %1449 = vmatpush.bf16.msra.mxu0 %v996
        %1450 = vmatpush.bf16.msra.mxu0 %v992
        %1451 = vmatpush.bf16.msra.mxu0 %v988
        %1452 = vmatpush.bf16.msra.mxu0 %v984
        %1453 = vmatpush.bf16.msra.mxu0 %v980
        %1454 = vmatpush.bf16.msra.mxu0 %v976
        %1455 = vmatpush.bf16.msra.mxu0 %v972
        %1456 = vmatpush.bf16.msra.mxu0 %v968
        %1457 = vmatmul.bf16.gmra.mxu0 %v435
        %v1458 = vpop.f32.mrf.mxu0
        %v1459 = vadd.f32 %v576, %v1458
        %v1460 = vpop.f32.mrf.mxu0
        %v1461 = vadd.f32 %v576, %v1460
        %1462 = vmatmul.bf16.gmra.mxu0 %v439
        %v1463 = vpop.f32.mrf.mxu0
        %v1464 = vadd.f32 %v576, %v1463
        %v1465 = vpop.f32.mrf.mxu0
        %v1466 = vadd.f32 %v576, %v1465
        %1467 = vdwg.mxu0
        %1468 = vmatpush.bf16.msra.mxu0 %v1028
        %1469 = vmatpush.bf16.msra.mxu0 %v1024
        %1470 = vmatpush.bf16.msra.mxu0 %v1020
        %1471 = vmatpush.bf16.msra.mxu0 %v1016
        %1472 = vmatpush.bf16.msra.mxu0 %v1012
        %1473 = vmatpush.bf16.msra.mxu0 %v1008
        %1474 = vmatpush.bf16.msra.mxu0 %v1004
        %1475 = vmatpush.bf16.msra.mxu0 %v1000
        %1476 = vmatmul.bf16.gmra.mxu0 %v436
        %v1477 = vpop.f32.mrf.mxu0
        %v1478 = vadd.f32 %v1459, %v1477
        %v1479 = vpop.f32.mrf.mxu0
        %v1480 = vadd.f32 %v1461, %v1479
        %1481 = vmatmul.bf16.gmra.mxu0 %v440
        %v1482 = vpop.f32.mrf.mxu0
        %v1483 = vadd.f32 %v1464, %v1482
        %v1484 = vpop.f32.mrf.mxu0
        %v1485 = vadd.f32 %v1466, %v1484
        %1486 = vdwg.mxu0
        %1487 = vmatpush.bf16.msra.mxu0 %v1060
        %1488 = vmatpush.bf16.msra.mxu0 %v1056
        %1489 = vmatpush.bf16.msra.mxu0 %v1052
        %1490 = vmatpush.bf16.msra.mxu0 %v1048
        %1491 = vmatpush.bf16.msra.mxu0 %v1044
        %1492 = vmatpush.bf16.msra.mxu0 %v1040
        %1493 = vmatpush.bf16.msra.mxu0 %v1036
        %1494 = vmatpush.bf16.msra.mxu0 %v1032
        %1495 = vmatmul.bf16.gmra.mxu0 %v437
        %v1496 = vpop.f32.mrf.mxu0
        %v1497 = vadd.f32 %v1478, %v1496
        %v1498 = vpop.f32.mrf.mxu0
        %v1499 = vadd.f32 %v1480, %v1498
        %1500 = vmatmul.bf16.gmra.mxu0 %v441
        %v1501 = vpop.f32.mrf.mxu0
        %v1502 = vadd.f32 %v1483, %v1501
        %v1503 = vpop.f32.mrf.mxu0
        %v1504 = vadd.f32 %v1485, %v1503
        %1505 = vdwg.mxu0
        %1506 = vmatpush.bf16.msra.mxu0 %v1092
        %1507 = vmatpush.bf16.msra.mxu0 %v1088
        %1508 = vmatpush.bf16.msra.mxu0 %v1084
        %1509 = vmatpush.bf16.msra.mxu0 %v1080
        %1510 = vmatpush.bf16.msra.mxu0 %v1076
        %1511 = vmatpush.bf16.msra.mxu0 %v1072
        %1512 = vmatpush.bf16.msra.mxu0 %v1068
        %1513 = vmatpush.bf16.msra.mxu0 %v1064
        %1514 = vmatmul.bf16.gmra.mxu0 %v438
        %v1515 = vpop.f32.mrf.mxu0
        %v1516 = vadd.f32 %v1497, %v1515
        %v1517 = vpop.f32.mrf.mxu0
        %v1518 = vadd.f32 %v1499, %v1517
        %1519 = vmatmul.bf16.gmra.mxu0 %v442
        %v1520 = vpop.f32.mrf.mxu0
        %v1521 = vadd.f32 %v1502, %v1520
        %v1522 = vpop.f32.mrf.mxu0
        %v1523 = vadd.f32 %v1504, %v1522
        %1524 = vdwg.mxu0
        %v1525 = vmax.f32 %v1288, 0.0
        %v1526 = vmax.f32 %v1364, 0.0
        %v1527 = vmax.f32 %v1440, 0.0
        %v1528 = vmax.f32 %v1516, 0.0
        %v1529 = vmax.f32 %v1290, 0.0
        %v1530 = vmax.f32 %v1366, 0.0
        %v1531 = vmax.f32 %v1442, 0.0
        %v1532 = vmax.f32 %v1518, 0.0
        %v1533 = vmax.f32 %v1293, 0.0
        %v1534 = vmax.f32 %v1369, 0.0
        %v1535 = vmax.f32 %v1445, 0.0
        %v1536 = vmax.f32 %v1521, 0.0
        %v1537 = vmax.f32 %v1295, 0.0
        %v1538 = vmax.f32 %v1371, 0.0
        %v1539 = vmax.f32 %v1447, 0.0
        %v1540 = vmax.f32 %v1523, 0.0
        %v1541 = vld [vmem:[%s359] sm:$0xf]
        %v1543 = vperm.slane %v1541, 0
        %v1544 = vperm.slane %v1541, 1
        %v1545 = vperm.slane %v1541, 2
        %v1546 = vperm.slane %v1541, 3
        %v1551 = vmul.f32 %v1525, %v1543
        %v1552 = vmul.f32 %v1526, %v1544
        %v1553 = vmul.f32 %v1527, %v1545
        %v1554 = vmul.f32 %v1528, %v1546
        %v1555 = vmul.f32 %v1529, %v1543
        %v1556 = vmul.f32 %v1530, %v1544
        %v1557 = vmul.f32 %v1531, %v1545
        %v1558 = vmul.f32 %v1532, %v1546
        %v1559 = vmul.f32 %v1533, %v1543
        %v1560 = vmul.f32 %v1534, %v1544
        %v1561 = vmul.f32 %v1535, %v1545
        %v1562 = vmul.f32 %v1536, %v1546
        %v1563 = vmul.f32 %v1537, %v1543
        %v1564 = vmul.f32 %v1538, %v1544
        %v1565 = vmul.f32 %v1539, %v1545
        %v1566 = vmul.f32 %v1540, %v1546
        %v1567 = vld [vmem:[%s369] sm:$0xf]
        %v1569 = vperm.slane %v1567, 0
        %v1570 = vperm.slane %v1567, 1
        %v1571 = vperm.slane %v1567, 2
        %v1572 = vperm.slane %v1567, 3
        %v1577 = vadd.f32 %v1551, %v1569
        %v1578 = vadd.f32 %v1552, %v1570
        %v1579 = vadd.f32 %v1553, %v1571
        %v1580 = vadd.f32 %v1554, %v1572
        %v1581 = vadd.f32 %v1555, %v1569
        %v1582 = vadd.f32 %v1556, %v1570
        %v1583 = vadd.f32 %v1557, %v1571
        %v1584 = vadd.f32 %v1558, %v1572
        %v1585 = vadd.f32 %v1559, %v1569
        %v1586 = vadd.f32 %v1560, %v1570
        %v1587 = vadd.f32 %v1561, %v1571
        %v1588 = vadd.f32 %v1562, %v1572
        %v1589 = vadd.f32 %v1563, %v1569
        %v1590 = vadd.f32 %v1564, %v1570
        %v1591 = vadd.f32 %v1565, %v1571
        %v1592 = vadd.f32 %v1566, %v1572
        %1593 = vst [vmem:[%s416] sm:$0xff] %v1577
        %1594 = vst [vmem:[%s416 + $0x8] sm:$0xff] %v1578
        %1595 = vst [vmem:[%s416 + $0x10] sm:$0xff] %v1579
        %1596 = vst [vmem:[%s416 + $0x18] sm:$0xff] %v1580
        %1597 = vst [vmem:[%s416 + $0x20] sm:$0xff] %v1581
        %1598 = vst [vmem:[%s416 + $0x28] sm:$0xff] %v1582
        %1599 = vst [vmem:[%s416 + $0x30] sm:$0xff] %v1583
        %1600 = vst [vmem:[%s416 + $0x38] sm:$0xff] %v1584
        %1601 = vst [vmem:[%s416 + $0x40] sm:$0xff] %v1585
        %1602 = vst [vmem:[%s416 + $0x48] sm:$0xff] %v1586
        %1603 = vst [vmem:[%s416 + $0x50] sm:$0xff] %v1587
        %1604 = vst [vmem:[%s416 + $0x58] sm:$0xff] %v1588
        %1605 = vst [vmem:[%s416 + $0x60] sm:$0xff] %v1589
        %1606 = vst [vmem:[%s416 + $0x68] sm:$0xff] %v1590
        %1607 = vst [vmem:[%s416 + $0x70] sm:$0xff] %v1591
        %1608 = vst [vmem:[%s416 + $0x78] sm:$0xff] %v1592
        %s1609 = sand.u32 %s182, 1
        %s1610 = scalar_lea.sflag [#allocation4], %s1609
        %s1611 = sand.u32 %s182, 1
        %s1612 = smul.addr %s1611, 128
        %s1613 = scalar_lea.vmem [#allocation11], %s1612
        // Predicated region
        $region61: #{tpu_custom_call.1} parent=39 // pred_check
          %p1614 = pneg %p192
        $region62: #{tpu_custom_call.1} parent=39 // pred_check_branch
          %1616 = sbr.rel (%p1614) target = $region64
        $region63: #{tpu_custom_call.1} parent=39 // pred_region
          %s1617 = smul.u32 4, %s33
          %1619 = vsyncadd %s1610, 0
          %s1620 = smul.addr %s1617, 4
          %s1621 = smul.addr %s32, 16
          %s1622 = sadd.s32 %s1620, %s1621
          %s1623 = smul.addr %s1622, 8
          %s1624 = scalar_lea.hbm %s5, %s1623
          %s1625 = sshll.u32 %s1613, 4
          %s1626 = int_to_ptr.vmem [resolvable:$true] %s1625
          %s1627 = sshll.u32 %s1624, 4
          %s1628 = int_to_ptr.hbm [resolvable:$true] %s1627
          %1633 = dma.vmem_to_hbm [thread:$0]  %s1626, 2048, %s1628, %s1610, 512, 512, 32
        $region64: #{tpu_custom_call.1} parent=39 // pred_fallthru
          _
      $region40: #{tpu_custom_call.1} parent=5 // pred_fallthru
        _
      %p1634 = scmp.le.s32.totalorder 2, %s23
      // Predicated region
      $region65: #{tpu_custom_call.1} parent=5 // pred_check
        %p1635 = pneg %p1634
      $region66: #{tpu_custom_call.1} parent=5 // pred_check_branch
        %1637 = sbr.rel (%p1635) target = $region68
      $region67: #{tpu_custom_call.1} parent=5 // pred_region
        %s1638 = ssub.s32 %s23, 2
        // Predicated region
        $region69: #{tpu_custom_call.1} parent=67 // pred_check
          %p1639 = pneg %p198
        $region70: #{tpu_custom_call.1} parent=67 // pred_check_branch
          %1641 = sbr.rel (%p1639) target = $region72
        $region71: #{tpu_custom_call.1} parent=67 // pred_region
          %s1642 = sand.u32 %s183, 1
          %s1643 = scalar_lea.sflag [#allocation4], %s1642
          %s1644 = sand.u32 %s183, 1
          %s1645 = smul.addr %s1644, 128
          %s1646 = scalar_lea.vmem [#allocation11], %s1645
          %1648 = dma.done %s1643, 2048
        $region72: #{tpu_custom_call.1} parent=67 // pred_fallthru
          _
      $region68: #{tpu_custom_call.1} parent=5 // pred_fallthru
        _
    $region6: #{tpu_custom_call.1} parent=1 // loop_footer
      %s27 = sadd.s32 1, %s23
    $region7: #{tpu_custom_call.1} parent=1 // loop_footer_branch
      %22 = sbr.rel target = $region3
    $region8: #{tpu_custom_call.1} parent=1 // loop_exit
      _
    %1649 = vsyncpa [#allocation3], 1
    %s1650 = scalar_lea.sflag [#allocation3], 1
    %1651 = vsyncpa %s1650, 1
    %1652 = vsyncpa [#allocation6], 1
    %s1653 = scalar_lea.sflag [#allocation6], 1
    %1654 = vsyncpa %s1653, 1
    %1655 = vsyncpa [#allocation9], 1
    %s1656 = scalar_lea.sflag [#allocation9], 1
    %1657 = vsyncpa %s1656, 1
    %1658 = vsyncpa [#allocation4], 1
    %s1659 = scalar_lea.sflag [#allocation4], 1
    %1660 = vsyncpa %s1659, 1

</llo_original>
